<compile_context>
chip_gen: v7x
topology: tpu7x:2x2x1
jax: 0.10.0
libtpu: 0.0.40
codegen_flags: <defaults>
</compile_context>

<pallas_src>
import functools

import jax
import jax.numpy as jnp
from jax.experimental import pallas as pl
from jax.experimental.pallas import tpu as pltpu


def _ffn_kernel(x_ref, wgu_ref, wd_ref, o_ref, acc_ref):
    # x_ref: [tm, H]   wgu_ref: [H, 2*ti]  (gate tile | up tile)
    # wd_ref: [ti, H]  o_ref: [tm, H]      acc_ref: [tm, H] f32 scratch
    k = pl.program_id(1)

    @pl.when(k == 0)
    def _init():
        acc_ref[...] = jnp.zeros_like(acc_ref)

    ti = wd_ref.shape[0]                      # static tile size

    # One fused MXU pass over x for gate and up projections (f32 accumulation).
    gu = jnp.dot(x_ref[...], wgu_ref[...], preferred_element_type=jnp.float32)
    gate = gu[:, :ti]
    up = gu[:, ti:]

    # SiLU(gate) * up in f32 (VPU / EUP), then cast down only for the MXU down-proj.
    h = gate * jax.nn.sigmoid(gate) * up
    acc_ref[...] += jnp.dot(h.astype(wd_ref.dtype), wd_ref[...],
                            preferred_element_type=jnp.float32)

    @pl.when(k == pl.num_programs(1) - 1)
    def _finalize():
        # dropout(p=0.0) is the identity
        o_ref[...] = acc_ref[...].astype(o_ref.dtype)


def demo_feed_forward(x, wg, wu, wd, *, tm=256, ti=512):
    """x: [B, S, H]; wg, wu: [H, I]; wd: [I, H] -> [B, S, H]"""
    B, S, H = x.shape
    I = wg.shape[1]
    T = B * S

    ti = min(ti, I)
    assert I % ti == 0, "intermediate size must be divisible by ti"
    nI = I // ti

    # Pad token count up to a multiple of tm (padded zero rows produce zero outputs).
    T_pad = pl.cdiv(T, tm) * tm
    x2 = x.reshape(T, H)
    if T_pad != T:
        x2 = jnp.pad(x2, ((0, T_pad - T), (0, 0)))

    # Re-lay gate/up weights so column-block k of width 2*ti is [gate tile k | up tile k].
    wgu = jnp.concatenate(
        [wg.reshape(H, nI, ti), wu.reshape(H, nI, ti)], axis=-1
    ).reshape(H, 2 * I)

    itemsize = jnp.dtype(x.dtype).itemsize
    cost = pl.CostEstimate(
        flops=6 * T_pad * H * I,                 # gate + up + down projections
        transcendentals=T_pad * I,               # sigmoid in SiLU
        bytes_accessed=(T_pad * H * 2 * itemsize          # x in, out
                        + (2 * H * I + I * H) * itemsize  # weights
                        ),
    )

    out2 = pl.pallas_call(
        _ffn_kernel,
        out_shape=jax.ShapeDtypeStruct((T_pad, H), x.dtype),
        grid_spec=pltpu.PrefetchScalarGridSpec(
            num_scalar_prefetch=0,
            grid=(T_pad // tm, nI),
            in_specs=[
                pl.BlockSpec((tm, H), lambda i, k: (i, 0)),       # x tile
                pl.BlockSpec((H, 2 * ti), lambda i, k: (0, k)),   # fused gate|up tile
                pl.BlockSpec((ti, H), lambda i, k: (k, 0)),       # down-proj tile
            ],
            out_specs=pl.BlockSpec((tm, H), lambda i, k: (i, 0)),  # resident across k
            scratch_shapes=[pltpu.VMEM((tm, H), jnp.float32)],     # f32 accumulator
        ),
        compiler_params=pltpu.CompilerParams(
            dimension_semantics=("parallel", "arbitrary"),
            vmem_limit_bytes=48 * 1024 * 1024,
        ),
        cost_estimate=cost,
    )(x2, wgu, wd)

    if T_pad != T:
        out2 = out2[:T]
    return out2.reshape(B, S, H)


def _reference(x, wg, wu, wd):
    gate = jnp.einsum("bsh,hi->bsi", x, wg)
    up = jnp.einsum("bsh,hi->bsi", x, wu)
    h = jax.nn.silu(gate) * up
    return jnp.einsum("bsi,ih->bsh", h, wd)


if __name__ == "__main__":
    # Small shapes consistent with the module (hidden/intermediate scaled down).
    B, S = 2, 8
    H = 256      # hidden_size (scaled down from 1024)
    I = 512      # intermediate_size (multiple of 32, as in the config rounding)

    key = jax.random.PRNGKey(0)
    kx, kg, ku, kd = jax.random.split(key, 4)

    dtype = jnp.bfloat16  # bf16 operands, f32 accumulation in-kernel
    x = jax.random.normal(kx, (B, S, H), dtype=jnp.float32).astype(dtype)
    # Deterministic "Linear" weights, stored transposed (in, out) for the kernel.
    wg = (jax.random.normal(kg, (H, I), dtype=jnp.float32) * (1.0 / H ** 0.5)).astype(dtype)
    wu = (jax.random.normal(ku, (H, I), dtype=jnp.float32) * (1.0 / H ** 0.5)).astype(dtype)
    wd = (jax.random.normal(kd, (I, H), dtype=jnp.float32) * (1.0 / I ** 0.5)).astype(dtype)

    # tm=128 keeps the demo's padded grid small; ti=256 exercises the I-accumulation path.
    out = demo_feed_forward(x, wg, wu, wd, tm=128, ti=256)
    out = jax.block_until_ready(out)

    ref = _reference(x.astype(jnp.float32), wg.astype(jnp.float32),
                     wu.astype(jnp.float32), wd.astype(jnp.float32))
    assert jnp.allclose(out.astype(jnp.float32), ref, atol=5e-2, rtol=5e-2), \
        "mismatch vs reference"

    print("KERNEL_OK")
</pallas_src>

<mosaic_0001>
module attributes {stable_mosaic.version = 11 : i64} {
  func.func @_ffn_kernel(%arg0: i32, %arg1: i32, %arg2: memref<128x256xbf16, #tpu.memory_space<vmem>>, %arg3: memref<256x512xbf16, #tpu.memory_space<vmem>>, %arg4: memref<256x256xbf16, #tpu.memory_space<vmem>>, %arg5: memref<128x256xbf16, #tpu.memory_space<vmem>>, %arg6: memref<128x256xf32, #tpu.memory_space<vmem>>) attributes {dimension_semantics = [#tpu.dimension_semantics<parallel>, #tpu.dimension_semantics<arbitrary>], iteration_bounds = array<i64: 1, 2>, scalar_prefetch = 0 : i64, scratch_operands = 1 : i64, tpu.core_type = #tpu.core_type<tc>, window_params = [{transform_indices = @transform_0, window_bounds = array<i64: 128, 256>}, {transform_indices = @transform_1, window_bounds = array<i64: 256, 512>}, {transform_indices = @transform_2, window_bounds = array<i64: 256, 256>}, {transform_indices = @transform_3, window_bounds = array<i64: 128, 256>}]} {
    %c0_i32 = arith.constant 0 : i32
    %0 = arith.cmpi eq, %arg1, %c0_i32 : i32
    %1 = arith.extui %0 : i1 to i32
    %c0_i32_0 = arith.constant 0 : i32
    %2 = arith.cmpi ne, %1, %c0_i32_0 : i32
    scf.if %2 {
      %cst_13 = arith.constant 0.000000e+00 : f32
      %24 = vector.broadcast %cst_13 : f32 to vector<128x256xf32>
      %c0_14 = arith.constant 0 : index
      %c0_15 = arith.constant 0 : index
      %25 = vector.load %arg6[%c0_14, %c0_15] : memref<128x256xf32, #tpu.memory_space<vmem>>, vector<128x256xf32>
      tpu.vector_store %arg6[%c0_14, %c0_15], %24 {strides = array<i32>} : memref<128x256xf32, #tpu.memory_space<vmem>>, vector<128x256xf32>,
    } else {
    }
    %c0 = arith.constant 0 : index
    %c0_1 = arith.constant 0 : index
    %3 = vector.load %arg2[%c0, %c0_1] : memref<128x256xbf16, #tpu.memory_space<vmem>>, vector<128x256xbf16>
    %c0_2 = arith.constant 0 : index
    %c0_3 = arith.constant 0 : index
    %4 = vector.load %arg3[%c0_2, %c0_3] : memref<256x512xbf16, #tpu.memory_space<vmem>>, vector<256x512xbf16>
    %cst = arith.constant dense<0.000000e+00> : vector<128x512xf32>
    %5 = tpu.matmul %3, %4, %cst {dimension_numbers = #tpu.dot_dimension_numbers<[1], [0], [0], [1], [0, 0, 1, 1], [], []>} : vector<128x256xbf16>, vector<256x512xbf16>, vector<128x512xf32> -> vector<128x512xf32>
    %6 = vector.extract_strided_slice %5 {offsets = [0, 0], sizes = [128, 256], strides = [1, 1]} : vector<128x512xf32> to vector<128x256xf32>
    %7 = vector.extract_strided_slice %5 {offsets = [0, 256], sizes = [128, 256], strides = [1, 1]} : vector<128x512xf32> to vector<128x256xf32>
    %8 = arith.negf %6 : vector<128x256xf32>
    %9 = math.exp %8 : vector<128x256xf32>
    %cst_4 = arith.constant 1.000000e+00 : f32
    %10 = vector.broadcast %cst_4 : f32 to vector<128x256xf32>
    %11 = arith.addf %10, %9 : vector<128x256xf32>
    %12 = arith.divf %10, %11 : vector<128x256xf32>
    %13 = arith.mulf %6, %12 : vector<128x256xf32>
    %14 = arith.mulf %13, %7 : vector<128x256xf32>
    %c0_5 = arith.constant 0 : index
    %c0_6 = arith.constant 0 : index
    %15 = vector.load %arg6[%c0_5, %c0_6] : memref<128x256xf32, #tpu.memory_space<vmem>>, vector<128x256xf32>
    %16 = arith.truncf %14 : vector<128x256xf32> to vector<128x256xbf16>
    %c0_7 = arith.constant 0 : index
    %c0_8 = arith.constant 0 : index
    %17 = vector.load %arg4[%c0_7, %c0_8] : memref<256x256xbf16, #tpu.memory_space<vmem>>, vector<256x256xbf16>
    %cst_9 = arith.constant dense<0.000000e+00> : vector<128x256xf32>
    %18 = tpu.matmul %16, %17, %cst_9 {dimension_numbers = #tpu.dot_dimension_numbers<[1], [0], [0], [1], [0, 0, 1, 1], [], []>} : vector<128x256xbf16>, vector<256x256xbf16>, vector<128x256xf32> -> vector<128x256xf32>
    %19 = arith.addf %15, %18 : vector<128x256xf32>
    %c0_10 = arith.constant 0 : index
    %c0_11 = arith.constant 0 : index
    %20 = vector.load %arg6[%c0_10, %c0_11] : memref<128x256xf32, #tpu.memory_space<vmem>>, vector<128x256xf32>
    tpu.vector_store %arg6[%c0_10, %c0_11], %19 {strides = array<i32>} : memref<128x256xf32, #tpu.memory_space<vmem>>, vector<128x256xf32>,
    %c1_i32 = arith.constant 1 : i32
    %21 = arith.cmpi eq, %arg1, %c1_i32 : i32
    %22 = arith.extui %21 : i1 to i32
    %c0_i32_12 = arith.constant 0 : i32
    %23 = arith.cmpi ne, %22, %c0_i32_12 : i32
    scf.if %23 {
      %c0_13 = arith.constant 0 : index
      %c0_14 = arith.constant 0 : index
      %24 = vector.load %arg6[%c0_13, %c0_14] : memref<128x256xf32, #tpu.memory_space<vmem>>, vector<128x256xf32>
      %25 = arith.truncf %24 : vector<128x256xf32> to vector<128x256xbf16>
      %c0_15 = arith.constant 0 : index
      %c0_16 = arith.constant 0 : index
      %26 = vector.load %arg5[%c0_15, %c0_16] : memref<128x256xbf16, #tpu.memory_space<vmem>>, vector<128x256xbf16>
      tpu.vector_store %arg5[%c0_15, %c0_16], %25 {strides = array<i32>} : memref<128x256xbf16, #tpu.memory_space<vmem>>, vector<128x256xbf16>,
    } else {
    }
    return
  }
  func.func @transform_0(%arg0: i32, %arg1: i32) -> (i32, i32) {
    %c0_i32 = arith.constant 0 : i32
    %c0_i32_0 = arith.constant 0 : i32
    return %arg0, %c0_i32 : i32, i32
  }
  func.func @transform_1(%arg0: i32, %arg1: i32) -> (i32, i32) {
    %c0_i32 = arith.constant 0 : i32
    %c0_i32_0 = arith.constant 0 : i32
    return %c0_i32, %arg1 : i32, i32
  }
  func.func @transform_2(%arg0: i32, %arg1: i32) -> (i32, i32) {
    %c0_i32 = arith.constant 0 : i32
    %c0_i32_0 = arith.constant 0 : i32
    return %arg1, %c0_i32 : i32, i32
  }
  func.func @transform_3(%arg0: i32, %arg1: i32) -> (i32, i32) {
    %c0_i32 = arith.constant 0 : i32
    %c0_i32_0 = arith.constant 0 : i32
    return %arg0, %c0_i32 : i32, i32
  }
}

</mosaic_0001>

<llo_original>
// kernel: tpu_custom_call.1
$region0: #{tpu_custom_call.1}
  #allocation0 [shape = 'u32[]', space=smem, size = 0x4, offset = 0x4, fixed_abs, tag = 'smem constant byte address 0x4 - core index']
  #allocation1 [shape = 'u32[144,128]{1,0:T(1,128)}', space=vmem, size = 0x12000, scoped, tag = 'internal scratch']
  #allocation2 [shape = 'f32[128,256]{1,0:T(8,128)}', space=vmem, size = 0x20000, scoped, tag = 'scratch operand']
  %s0 = inlined_call_operand.hbm [shape: bf16[128,256], index: 0, kind: input, shape index: {}]
  %s1 = inlined_call_operand.hbm [shape: bf16[256,1024], index: 1, kind: input, shape index: {}]
  %s2 = inlined_call_operand.hbm [shape: bf16[512,256], index: 2, kind: input, shape index: {}]
  %s3 = inlined_call_operand.hbm [shape: bf16[128,256], index: 3, kind: output, shape index: {}]
  %s4 = sld [smem:[#allocation0]]
  $region65: #{tpu_custom_call.1} parent=0
    _
  %s6 = ssub.s32 1, %s4
  %s7 = scalar_select 0, %s6, %s4
  $region1: #{tpu_custom_call.1} parent=0
    #allocation3 [shape = 'u8[65536]{0}', space=vmem, size = 0x10000, scoped, tag = 'input window, operand 0, single buffered']
    #allocation4 [shape = 's32[2]{0}', space=sflag, size = 0x8, scoped, tag = 'scoped memory for tpu_custom_call.1']
    #allocation5 [shape = 's32[2]{0}', space=sflag, size = 0x8, scoped, tag = 'scoped memory for tpu_custom_call.1']
    #allocation6 [shape = 'u8[524288]{0}', space=vmem, size = 0x80000, scoped, tag = 'input window, operand 1']
    #allocation7 [shape = 's32[2]{0}', space=sflag, size = 0x8, scoped, tag = 'scoped memory for tpu_custom_call.1']
    #allocation8 [shape = 'u8[262144]{0}', space=vmem, size = 0x40000, scoped, tag = 'input window, operand 2']
    #allocation9 [shape = 'u8[65536]{0}', space=vmem, size = 0x10000, scoped, tag = 'output window, operand 0, single buffered']
    %8 = vsyncpa [#allocation4], 0
    %9 = vsyncpa [#allocation7], 0
    %s10 = scalar_lea.sflag [#allocation7], 1
    %11 = vsyncpa %s10, 0
    %12 = vsyncpa [#allocation5], 0
    loop: start=0, step=1, limit=4
    $region2: #{tpu_custom_call.1} parent=1 // loop_pre_header
      _
    $region3: #{tpu_custom_call.1} parent=1 // loop_header
      %s14 = sphi 0, %s18
      %p15 = scmp.ge.s32.totalorder %s14, 4
      %s21 = sphi 0, %s33
      %s22 = sphi 0, %s29
      %s23 = sphi 0, %s21
      %s24 = sphi 0, %s22
      %s25 = sphi 0, %s23
      %s26 = sphi 0, %s24
      %s36 = sphi 0, %s38
      %s39 = sphi 0, %s36
      %s40 = sphi 0, %s39
      %s56 = sphi 0, %s40
      %s62 = sphi 0, %s64
      %s65 = sphi 0, %s62
      %s66 = sphi 0, %s65
      %s82 = sphi 0, %s66
      %s88 = sphi 0, %s90
      %s91 = sphi 0, %s88
      %s92 = sphi 0, %s91
      %s108 = sphi 0, %s92
      %s114 = sphi 0, %s116
      %s117 = sphi 0, %s114
      %s118 = sphi 0, %s117
      %s134 = sphi 0, %s118
    $region4: #{tpu_custom_call.1} parent=1 // loop_header_branch
      %17 = sbr.rel (%p15) target = $region8
    $region5: #{tpu_custom_call.1} parent=1 // loop_body
      %s19 = ssub.s32 %s14, 1
      %s20 = ssub.s32 %s14, 2
      %s27 = sadd.s32 1, %s22
      %p28 = scmp.ge.s32.totalorder %s27, 2
      %s29 = scalar_select %p28, 0, %s27
      %s30 = sadd.s32 1, %s21
      %s31 = scalar_select %p28, %s30, %s21
      %p32 = scmp.ge.s32.totalorder %s31, 1
      %s33 = scalar_select %p32, 0, %s31
      %s34 = ssub.s32 %s21, %s33
      %p35 = scmp.eq.s32.totalorder %s34, 0
      %s37 = sadd.s32 %s36, 1
      %s38 = scalar_select %p35, %s36, %s37
      %p41 = pneg %p35
      %p42 = scmp.eq.s32.totalorder %s14, 1
      %p43 = por %p41, %p42
      %p44 = scmp.ne.s32.totalorder %s36, %s39
      %p45 = scmp.eq.s32.totalorder %s14, 0
      %p46 = por %p44, %p45
      %p47 = scmp.ne.s32.totalorder %s36, %s39
      %p48 = scmp.eq.s32.totalorder %s19, 1
      %p49 = por %p47, %p48
      %p50 = scmp.ne.s32.totalorder %s39, %s40
      %p51 = scmp.eq.s32.totalorder %s19, 0
      %p52 = por %p50, %p51
      %p53 = scmp.ne.s32.totalorder %s39, %s40
      %p54 = scmp.eq.s32.totalorder %s20, 1
      %p55 = por %p53, %p54
      %p57 = scmp.ne.s32.totalorder %s40, %s56
      %p58 = scmp.eq.s32.totalorder %s20, 0
      %p59 = por %p57, %p58
      %s60 = ssub.s32 %s22, %s29
      %p61 = scmp.eq.s32.totalorder %s60, 0
      %s63 = sadd.s32 %s62, 1
      %s64 = scalar_select %p61, %s62, %s63
      %p67 = pneg %p61
      %p68 = scmp.eq.s32.totalorder %s14, 1
      %p69 = por %p67, %p68
      %p70 = scmp.ne.s32.totalorder %s62, %s65
      %p71 = scmp.eq.s32.totalorder %s14, 0
      %p72 = por %p70, %p71
      %p73 = scmp.ne.s32.totalorder %s62, %s65
      %p74 = scmp.eq.s32.totalorder %s19, 1
      %p75 = por %p73, %p74
      %p76 = scmp.ne.s32.totalorder %s65, %s66
      %p77 = scmp.eq.s32.totalorder %s19, 0
      %p78 = por %p76, %p77
      %p79 = scmp.ne.s32.totalorder %s65, %s66
      %p80 = scmp.eq.s32.totalorder %s20, 1
      %p81 = por %p79, %p80
      %p83 = scmp.ne.s32.totalorder %s66, %s82
      %p84 = scmp.eq.s32.totalorder %s20, 0
      %p85 = por %p83, %p84
      %s86 = ssub.s32 %s22, %s29
      %p87 = scmp.eq.s32.totalorder %s86, 0
      %s89 = sadd.s32 %s88, 1
      %s90 = scalar_select %p87, %s88, %s89
      %p93 = pneg %p87
      %p94 = scmp.eq.s32.totalorder %s14, 1
      %p95 = por %p93, %p94
      %p96 = scmp.ne.s32.totalorder %s88, %s91
      %p97 = scmp.eq.s32.totalorder %s14, 0
      %p98 = por %p96, %p97
      %p99 = scmp.ne.s32.totalorder %s88, %s91
      %p100 = scmp.eq.s32.totalorder %s19, 1
      %p101 = por %p99, %p100
      %p102 = scmp.ne.s32.totalorder %s91, %s92
      %p103 = scmp.eq.s32.totalorder %s19, 0
      %p104 = por %p102, %p103
      %p105 = scmp.ne.s32.totalorder %s91, %s92
      %p106 = scmp.eq.s32.totalorder %s20, 1
      %p107 = por %p105, %p106
      %p109 = scmp.ne.s32.totalorder %s92, %s108
      %p110 = scmp.eq.s32.totalorder %s20, 0
      %p111 = por %p109, %p110
      %s112 = ssub.s32 %s21, %s33
      %p113 = scmp.eq.s32.totalorder %s112, 0
      %s115 = sadd.s32 %s114, 1
      %s116 = scalar_select %p113, %s114, %s115
      %p119 = pneg %p113
      %p120 = scmp.eq.s32.totalorder %s14, 1
      %p121 = por %p119, %p120
      %p122 = scmp.ne.s32.totalorder %s114, %s117
      %p123 = scmp.eq.s32.totalorder %s14, 0
      %p124 = por %p122, %p123
      %p125 = scmp.ne.s32.totalorder %s114, %s117
      %p126 = scmp.eq.s32.totalorder %s19, 1
      %p127 = por %p125, %p126
      %p128 = scmp.ne.s32.totalorder %s117, %s118
      %p129 = scmp.eq.s32.totalorder %s19, 0
      %p130 = por %p128, %p129
      %p131 = scmp.ne.s32.totalorder %s117, %s118
      %p132 = scmp.eq.s32.totalorder %s20, 1
      %p133 = por %p131, %p132
      %p135 = scmp.ne.s32.totalorder %s118, %s134
      %p136 = scmp.eq.s32.totalorder %s20, 0
      %p137 = por %p135, %p136
      %p138 = scmp.le.s32.totalorder 1, %s14
      %p139 = scmp.lt.s32.totalorder %s14, 3
      %p140 = pnand %p138, %p139
      %p141 = pneg %p140
      // Predicated region
      $region9: #{tpu_custom_call.1} parent=5 // pred_check
        _
      $region10: #{tpu_custom_call.1} parent=5 // pred_check_branch
        %143 = sbr.rel (%p140) target = $region12
      $region11: #{tpu_custom_call.1} parent=5 // pred_region
        %s144 = ssub.s32 %s14, 1
        // Predicated region
        $region13: #{tpu_custom_call.1} parent=11 // pred_check
          %p145 = pneg %p52
        $region14: #{tpu_custom_call.1} parent=11 // pred_check_branch
          %147 = sbr.rel (%p145) target = $region16
        $region15: #{tpu_custom_call.1} parent=11 // pred_region
          %s148 = smul.u32 16, %s23
          %s150 = ssub.s32 2048, 2048
          %151 = vsyncadd [#allocation4], %s150
          %s152 = smul.addr %s148, 2
          %s153 = smul.addr %s152, 64
          %s154 = scalar_lea.hbm %s0, %s153
          %s155 = sshll.u32 [#allocation3], 4
          %s156 = int_to_ptr.vmem [resolvable:$true] %s155
          %161 = dma.hbm_to_vmem [thread:$0]  %s154, 2048, %s156, [#allocation4], 128, 128, 8
        $region16: #{tpu_custom_call.1} parent=11 // pred_fallthru
          _
      $region12: #{tpu_custom_call.1} parent=5 // pred_fallthru
        _
      %p162 = scmp.lt.s32.totalorder %s14, 2
      // Predicated region
      $region17: #{tpu_custom_call.1} parent=5 // pred_check
        %p163 = pneg %p162
      $region18: #{tpu_custom_call.1} parent=5 // pred_check_branch
        %165 = sbr.rel (%p163) target = $region20
      $region19: #{tpu_custom_call.1} parent=5 // pred_region
        // Predicated region
        $region21: #{tpu_custom_call.1} parent=19 // pred_check
          %p166 = pneg %p72
        $region22: #{tpu_custom_call.1} parent=19 // pred_check_branch
          %168 = sbr.rel (%p166) target = $region24
        $region23: #{tpu_custom_call.1} parent=19 // pred_region
          %s169 = sand.u32 %s14, 1
          %s170 = scalar_lea.sflag [#allocation7], %s169
          %s171 = sand.u32 %s62, 1
          %s172 = smul.addr %s171, 512
          %s173 = scalar_lea.vmem [#allocation6], %s172
          %s174 = smul.u32 4, %s22
          %s176 = ssub.s32 8192, 8192
          %177 = vsyncadd %s170, %s176
          %s178 = smul.addr %s174, 64
          %s179 = scalar_lea.hbm %s1, %s178
          %s180 = sshll.u32 %s173, 4
          %s181 = int_to_ptr.vmem [resolvable:$true] %s180
          %186 = dma.hbm_to_vmem [thread:$0]  %s179, 8192, %s181, %s170, 512, 256, 16
        $region24: #{tpu_custom_call.1} parent=19 // pred_fallthru
          _
        // Predicated region
        $region25: #{tpu_custom_call.1} parent=19 // pred_check
          %p187 = pneg %p98
        $region26: #{tpu_custom_call.1} parent=19 // pred_check_branch
          %189 = sbr.rel (%p187) target = $region28
        $region27: #{tpu_custom_call.1} parent=19 // pred_region
          %s190 = sand.u32 %s14, 1
          %s191 = scalar_lea.sflag [#allocation7], %s190
          %s192 = sand.u32 %s88, 1
          %s193 = smul.addr %s192, 256
          %s194 = scalar_lea.vmem [#allocation8], %s193
          %s195 = smul.u32 32, %s22
          %s197 = ssub.s32 4096, 4096
          %198 = vsyncadd %s191, %s197
          %s199 = smul.addr %s195, 2
          %s200 = smul.addr %s199, 64
          %s201 = scalar_lea.hbm %s2, %s200
          %s202 = sshll.u32 %s194, 4
          %s203 = int_to_ptr.vmem [resolvable:$true] %s202
          %208 = dma.hbm_to_vmem [thread:$0]  %s201, 4096, %s203, %s191, 128, 128, 8
        $region28: #{tpu_custom_call.1} parent=19 // pred_fallthru
          _
      $region20: #{tpu_custom_call.1} parent=5 // pred_fallthru
        _
      %p209 = scmp.le.s32.totalorder 1, %s14
      %p210 = scmp.lt.s32.totalorder %s14, 3
      %p211 = pnand %p209, %p210
      %p212 = pneg %p211
      // Predicated region
      $region29: #{tpu_custom_call.1} parent=5 // pred_check
        _
      $region30: #{tpu_custom_call.1} parent=5 // pred_check_branch
        %214 = sbr.rel (%p211) target = $region32
      $region31: #{tpu_custom_call.1} parent=5 // pred_region
        %s215 = ssub.s32 %s14, 1
        // Predicated region
        $region33: #{tpu_custom_call.1} parent=31 // pred_check
          %p216 = pneg %p52
        $region34: #{tpu_custom_call.1} parent=31 // pred_check_branch
          %218 = sbr.rel (%p216) target = $region36
        $region35: #{tpu_custom_call.1} parent=31 // pred_region
          %219 = dma.done [#allocation4], 2048
        $region36: #{tpu_custom_call.1} parent=31 // pred_fallthru
          _
        %s220 = sand.u32 %s19, 1
        %s221 = scalar_lea.sflag [#allocation7], %s220
        %s222 = sand.u32 %s65, 1
        %s223 = smul.addr %s222, 512
        %s224 = scalar_lea.vmem [#allocation6], %s223
        // Predicated region
        $region37: #{tpu_custom_call.1} parent=31 // pred_check
          %p225 = pneg %p78
        $region38: #{tpu_custom_call.1} parent=31 // pred_check_branch
          %227 = sbr.rel (%p225) target = $region40
        $region39: #{tpu_custom_call.1} parent=31 // pred_region
          %228 = dma.done %s221, 8192
        $region40: #{tpu_custom_call.1} parent=31 // pred_fallthru
          _
        %s229 = sand.u32 %s19, 1
        %s230 = scalar_lea.sflag [#allocation7], %s229
        %s231 = sand.u32 %s91, 1
        %s232 = smul.addr %s231, 256
        %s233 = scalar_lea.vmem [#allocation8], %s232
        // Predicated region
        $region41: #{tpu_custom_call.1} parent=31 // pred_check
          %p234 = pneg %p104
        $region42: #{tpu_custom_call.1} parent=31 // pred_check_branch
          %236 = sbr.rel (%p234) target = $region44
        $region43: #{tpu_custom_call.1} parent=31 // pred_region
          %237 = dma.done %s230, 4096
        $region44: #{tpu_custom_call.1} parent=31 // pred_fallthru
          _
        %p238 = pneg %p52
        %p239 = pneg %p49
        %s240 = sand.u32 %s19, 1
        %s241 = scalar_lea.sflag [#allocation7], %s240
        %s242 = sand.u32 %s65, 1
        %s243 = smul.addr %s242, 512
        %s244 = scalar_lea.vmem [#allocation6], %s243
        %p245 = pneg %p78
        %p246 = pneg %p75
        %s247 = sand.u32 %s19, 1
        %s248 = scalar_lea.sflag [#allocation7], %s247
        %s249 = sand.u32 %s91, 1
        %s250 = smul.addr %s249, 256
        %s251 = scalar_lea.vmem [#allocation8], %s250
        %p252 = pneg %p104
        %p253 = pneg %p101
        %p254 = pneg %p130
        %p255 = pneg %p127
        %s256 = smul.u32 16, %s23
        %s257 = smul.u32 4, %s24
        %s258 = smul.u32 32, %s24
        %s259 = smul.u32 16, %s23
        %p260 = scmp.eq.s32.totalorder %s24, 0
        // Predicated region
        $region45: #{tpu_custom_call.1} parent=31 // pred_check
          %p261 = pneg %p260
        $region46: #{tpu_custom_call.1} parent=31 // pred_check_branch
          %263 = sbr.rel (%p261) target = $region48
        $region47: #{tpu_custom_call.1} parent=31 // pred_region
          %264 = vst [vmem:[#allocation2] sm:$0xff] 0.0
          %265 = vst [vmem:[#allocation2 + $0x8] sm:$0xff] 0.0
          %266 = vst [vmem:[#allocation2 + $0x10] sm:$0xff] 0.0
          %267 = vst [vmem:[#allocation2 + $0x18] sm:$0xff] 0.0
          %268 = vst [vmem:[#allocation2 + $0x20] sm:$0xff] 0.0
          %269 = vst [vmem:[#allocation2 + $0x28] sm:$0xff] 0.0
          %270 = vst [vmem:[#allocation2 + $0x30] sm:$0xff] 0.0
          %271 = vst [vmem:[#allocation2 + $0x38] sm:$0xff] 0.0
          %272 = vst [vmem:[#allocation2 + $0x40] sm:$0xff] 0.0
          %273 = vst [vmem:[#allocation2 + $0x48] sm:$0xff] 0.0
          %274 = vst [vmem:[#allocation2 + $0x50] sm:$0xff] 0.0
          %275 = vst [vmem:[#allocation2 + $0x58] sm:$0xff] 0.0
          %276 = vst [vmem:[#allocation2 + $0x60] sm:$0xff] 0.0
          %277 = vst [vmem:[#allocation2 + $0x68] sm:$0xff] 0.0
          %278 = vst [vmem:[#allocation2 + $0x70] sm:$0xff] 0.0
          %279 = vst [vmem:[#allocation2 + $0x78] sm:$0xff] 0.0
          %280 = vst [vmem:[#allocation2 + $0x80] sm:$0xff] 0.0
          %281 = vst [vmem:[#allocation2 + $0x88] sm:$0xff] 0.0
          %282 = vst [vmem:[#allocation2 + $0x90] sm:$0xff] 0.0
          %283 = vst [vmem:[#allocation2 + $0x98] sm:$0xff] 0.0
          %284 = vst [vmem:[#allocation2 + $0xa0] sm:$0xff] 0.0
          %285 = vst [vmem:[#allocation2 + $0xa8] sm:$0xff] 0.0
          %286 = vst [vmem:[#allocation2 + $0xb0] sm:$0xff] 0.0
          %287 = vst [vmem:[#allocation2 + $0xb8] sm:$0xff] 0.0
          %288 = vst [vmem:[#allocation2 + $0xc0] sm:$0xff] 0.0
          %289 = vst [vmem:[#allocation2 + $0xc8] sm:$0xff] 0.0
          %290 = vst [vmem:[#allocation2 + $0xd0] sm:$0xff] 0.0
          %291 = vst [vmem:[#allocation2 + $0xd8] sm:$0xff] 0.0
          %292 = vst [vmem:[#allocation2 + $0xe0] sm:$0xff] 0.0
          %293 = vst [vmem:[#allocation2 + $0xe8] sm:$0xff] 0.0
          %294 = vst [vmem:[#allocation2 + $0xf0] sm:$0xff] 0.0
          %295 = vst [vmem:[#allocation2 + $0xf8] sm:$0xff] 0.0
        $region48: #{tpu_custom_call.1} parent=31 // pred_fallthru
          _
        %v296 = vld [vmem:[#allocation3] sm:$0xff]
        %v297 = vld [vmem:[#allocation3 + $0x8] sm:$0xff]
        %v298 = vld [vmem:[#allocation3 + $0x10] sm:$0xff]
        %v299 = vld [vmem:[#allocation3 + $0x18] sm:$0xff]
        %v300 = vld [vmem:[#allocation3 + $0x20] sm:$0xff]
        %v301 = vld [vmem:[#allocation3 + $0x28] sm:$0xff]
        %v302 = vld [vmem:[#allocation3 + $0x30] sm:$0xff]
        %v303 = vld [vmem:[#allocation3 + $0x38] sm:$0xff]
        %v304 = vld [vmem:[#allocation3 + $0x40] sm:$0xff]
        %v305 = vld [vmem:[#allocation3 + $0x48] sm:$0xff]
        %v306 = vld [vmem:[#allocation3 + $0x50] sm:$0xff]
        %v307 = vld [vmem:[#allocation3 + $0x58] sm:$0xff]
        %v308 = vld [vmem:[#allocation3 + $0x60] sm:$0xff]
        %v309 = vld [vmem:[#allocation3 + $0x68] sm:$0xff]
        %v310 = vld [vmem:[#allocation3 + $0x70] sm:$0xff]
        %v311 = vld [vmem:[#allocation3 + $0x78] sm:$0xff]
        %v312 = vld [vmem:[%s224] sm:$0xff]
        %v313 = vld [vmem:[%s224 + $0x8] sm:$0xff]
        %v314 = vld [vmem:[%s224 + $0x10] sm:$0xff]
        %v315 = vld [vmem:[%s224 + $0x18] sm:$0xff]
        %v316 = vld [vmem:[%s224 + $0x20] sm:$0xff]
        %v317 = vld [vmem:[%s224 + $0x28] sm:$0xff]
        %v318 = vld [vmem:[%s224 + $0x30] sm:$0xff]
        %v319 = vld [vmem:[%s224 + $0x38] sm:$0xff]
        %v320 = vld [vmem:[%s224 + $0x40] sm:$0xff]
        %v321 = vld [vmem:[%s224 + $0x48] sm:$0xff]
        %v322 = vld [vmem:[%s224 + $0x50] sm:$0xff]
        %v323 = vld [vmem:[%s224 + $0x58] sm:$0xff]
        %v324 = vld [vmem:[%s224 + $0x60] sm:$0xff]
        %v325 = vld [vmem:[%s224 + $0x68] sm:$0xff]
        %v326 = vld [vmem:[%s224 + $0x70] sm:$0xff]
        %v327 = vld [vmem:[%s224 + $0x78] sm:$0xff]
        %v328 = vld [vmem:[%s224 + $0x80] sm:$0xff]
        %v329 = vld [vmem:[%s224 + $0x88] sm:$0xff]
        %v330 = vld [vmem:[%s224 + $0x90] sm:$0xff]
        %v331 = vld [vmem:[%s224 + $0x98] sm:$0xff]
        %v332 = vld [vmem:[%s224 + $0xa0] sm:$0xff]
        %v333 = vld [vmem:[%s224 + $0xa8] sm:$0xff]
        %v334 = vld [vmem:[%s224 + $0xb0] sm:$0xff]
        %v335 = vld [vmem:[%s224 + $0xb8] sm:$0xff]
        %v336 = vld [vmem:[%s224 + $0xc0] sm:$0xff]
        %v337 = vld [vmem:[%s224 + $0xc8] sm:$0xff]
        %v338 = vld [vmem:[%s224 + $0xd0] sm:$0xff]
        %v339 = vld [vmem:[%s224 + $0xd8] sm:$0xff]
        %v340 = vld [vmem:[%s224 + $0xe0] sm:$0xff]
        %v341 = vld [vmem:[%s224 + $0xe8] sm:$0xff]
        %v342 = vld [vmem:[%s224 + $0xf0] sm:$0xff]
        %v343 = vld [vmem:[%s224 + $0xf8] sm:$0xff]
        %v344 = vld [vmem:[%s224 + $0x100] sm:$0xff]
        %v345 = vld [vmem:[%s224 + $0x108] sm:$0xff]
        %v346 = vld [vmem:[%s224 + $0x110] sm:$0xff]
        %v347 = vld [vmem:[%s224 + $0x118] sm:$0xff]
        %v348 = vld [vmem:[%s224 + $0x120] sm:$0xff]
        %v349 = vld [vmem:[%s224 + $0x128] sm:$0xff]
        %v350 = vld [vmem:[%s224 + $0x130] sm:$0xff]
        %v351 = vld [vmem:[%s224 + $0x138] sm:$0xff]
        %v352 = vld [vmem:[%s224 + $0x140] sm:$0xff]
        %v353 = vld [vmem:[%s224 + $0x148] sm:$0xff]
        %v354 = vld [vmem:[%s224 + $0x150] sm:$0xff]
        %v355 = vld [vmem:[%s224 + $0x158] sm:$0xff]
        %v356 = vld [vmem:[%s224 + $0x160] sm:$0xff]
        %v357 = vld [vmem:[%s224 + $0x168] sm:$0xff]
        %v358 = vld [vmem:[%s224 + $0x170] sm:$0xff]
        %v359 = vld [vmem:[%s224 + $0x178] sm:$0xff]
        %v360 = vld [vmem:[%s224 + $0x180] sm:$0xff]
        %v361 = vld [vmem:[%s224 + $0x188] sm:$0xff]
        %v362 = vld [vmem:[%s224 + $0x190] sm:$0xff]
        %v363 = vld [vmem:[%s224 + $0x198] sm:$0xff]
        %v364 = vld [vmem:[%s224 + $0x1a0] sm:$0xff]
        %v365 = vld [vmem:[%s224 + $0x1a8] sm:$0xff]
        %v366 = vld [vmem:[%s224 + $0x1b0] sm:$0xff]
        %v367 = vld [vmem:[%s224 + $0x1b8] sm:$0xff]
        %v368 = vld [vmem:[%s224 + $0x1c0] sm:$0xff]
        %v369 = vld [vmem:[%s224 + $0x1c8] sm:$0xff]
        %v370 = vld [vmem:[%s224 + $0x1d0] sm:$0xff]
        %v371 = vld [vmem:[%s224 + $0x1d8] sm:$0xff]
        %v372 = vld [vmem:[%s224 + $0x1e0] sm:$0xff]
        %v373 = vld [vmem:[%s224 + $0x1e8] sm:$0xff]
        %v374 = vld [vmem:[%s224 + $0x1f0] sm:$0xff]
        %v375 = vld [vmem:[%s224 + $0x1f8] sm:$0xff]
        %v392 = vunpack.c.l.b16 %v296
        %v393 = vunpack.c.h.b16 %v296
        %v394 = vunpack.c.l.b16 %v297
        %v395 = vunpack.c.h.b16 %v297
        %v396 = vunpack.c.l.b16 %v298
        %v397 = vunpack.c.h.b16 %v298
        %v398 = vunpack.c.l.b16 %v299
        %v399 = vunpack.c.h.b16 %v299
        %v400 = vunpack.c.l.b16 %v300
        %v401 = vunpack.c.h.b16 %v300
        %v402 = vunpack.c.l.b16 %v301
        %v403 = vunpack.c.h.b16 %v301
        %v404 = vunpack.c.l.b16 %v302
        %v405 = vunpack.c.h.b16 %v302
        %v406 = vunpack.c.l.b16 %v303
        %v407 = vunpack.c.h.b16 %v303
        %v408 = vunpack.c.l.b16 %v304
        %v409 = vunpack.c.h.b16 %v304
        %v410 = vunpack.c.l.b16 %v305
        %v411 = vunpack.c.h.b16 %v305
        %v412 = vunpack.c.l.b16 %v306
        %v413 = vunpack.c.h.b16 %v306
        %v414 = vunpack.c.l.b16 %v307
        %v415 = vunpack.c.h.b16 %v307
        %v416 = vunpack.c.l.b16 %v308
        %v417 = vunpack.c.h.b16 %v308
        %v418 = vunpack.c.l.b16 %v309
        %v419 = vunpack.c.h.b16 %v309
        %v420 = vunpack.c.l.b16 %v310
        %v421 = vunpack.c.h.b16 %v310
        %v422 = vunpack.c.l.b16 %v311
        %v423 = vunpack.c.h.b16 %v311
        %v424 = vpack.c.b16 %v394, %v392
        %v425 = vpack.c.b16 %v395, %v393
        %v426 = vpack.c.b16 %v398, %v396
        %v427 = vpack.c.b16 %v399, %v397
        %v428 = vpack.c.b16 %v402, %v400
        %v429 = vpack.c.b16 %v403, %v401
        %v430 = vpack.c.b16 %v406, %v404
        %v431 = vpack.c.b16 %v407, %v405
        %v432 = vpack.c.b16 %v410, %v408
        %v433 = vpack.c.b16 %v411, %v409
        %v434 = vpack.c.b16 %v414, %v412
        %v435 = vpack.c.b16 %v415, %v413
        %v436 = vpack.c.b16 %v418, %v416
        %v437 = vpack.c.b16 %v419, %v417
        %v438 = vpack.c.b16 %v422, %v420
        %v439 = vpack.c.b16 %v423, %v421
        %v520 = vunpack.c.l.b16 %v312
        %v521 = vunpack.c.h.b16 %v312
        %v522 = vunpack.c.l.b16 %v313
        %v523 = vunpack.c.h.b16 %v313
        %v524 = vunpack.c.l.b16 %v314
        %v525 = vunpack.c.h.b16 %v314
        %v526 = vunpack.c.l.b16 %v315
        %v527 = vunpack.c.h.b16 %v315
        %v528 = vunpack.c.l.b16 %v316
        %v529 = vunpack.c.h.b16 %v316
        %v530 = vunpack.c.l.b16 %v317
        %v531 = vunpack.c.h.b16 %v317
        %v532 = vunpack.c.l.b16 %v318
        %v533 = vunpack.c.h.b16 %v318
        %v534 = vunpack.c.l.b16 %v319
        %v535 = vunpack.c.h.b16 %v319
        %v536 = vunpack.c.l.b16 %v320
        %v537 = vunpack.c.h.b16 %v320
        %v538 = vunpack.c.l.b16 %v321
        %v539 = vunpack.c.h.b16 %v321
        %v540 = vunpack.c.l.b16 %v322
        %v541 = vunpack.c.h.b16 %v322
        %v542 = vunpack.c.l.b16 %v323
        %v543 = vunpack.c.h.b16 %v323
        %v544 = vunpack.c.l.b16 %v324
        %v545 = vunpack.c.h.b16 %v324
        %v546 = vunpack.c.l.b16 %v325
        %v547 = vunpack.c.h.b16 %v325
        %v548 = vunpack.c.l.b16 %v326
        %v549 = vunpack.c.h.b16 %v326
        %v550 = vunpack.c.l.b16 %v327
        %v551 = vunpack.c.h.b16 %v327
        %v552 = vunpack.c.l.b16 %v328
        %v553 = vunpack.c.h.b16 %v328
        %v554 = vunpack.c.l.b16 %v329
        %v555 = vunpack.c.h.b16 %v329
        %v556 = vunpack.c.l.b16 %v330
        %v557 = vunpack.c.h.b16 %v330
        %v558 = vunpack.c.l.b16 %v331
        %v559 = vunpack.c.h.b16 %v331
        %v560 = vunpack.c.l.b16 %v332
        %v561 = vunpack.c.h.b16 %v332
        %v562 = vunpack.c.l.b16 %v333
        %v563 = vunpack.c.h.b16 %v333
        %v564 = vunpack.c.l.b16 %v334
        %v565 = vunpack.c.h.b16 %v334
        %v566 = vunpack.c.l.b16 %v335
        %v567 = vunpack.c.h.b16 %v335
        %v568 = vunpack.c.l.b16 %v336
        %v569 = vunpack.c.h.b16 %v336
        %v570 = vunpack.c.l.b16 %v337
        %v571 = vunpack.c.h.b16 %v337
        %v572 = vunpack.c.l.b16 %v338
        %v573 = vunpack.c.h.b16 %v338
        %v574 = vunpack.c.l.b16 %v339
        %v575 = vunpack.c.h.b16 %v339
        %v576 = vunpack.c.l.b16 %v340
        %v577 = vunpack.c.h.b16 %v340
        %v578 = vunpack.c.l.b16 %v341
        %v579 = vunpack.c.h.b16 %v341
        %v580 = vunpack.c.l.b16 %v342
        %v581 = vunpack.c.h.b16 %v342
        %v582 = vunpack.c.l.b16 %v343
        %v583 = vunpack.c.h.b16 %v343
        %v584 = vunpack.c.l.b16 %v344
        %v585 = vunpack.c.h.b16 %v344
        %v586 = vunpack.c.l.b16 %v345
        %v587 = vunpack.c.h.b16 %v345
        %v588 = vunpack.c.l.b16 %v346
        %v589 = vunpack.c.h.b16 %v346
        %v590 = vunpack.c.l.b16 %v347
        %v591 = vunpack.c.h.b16 %v347
        %v592 = vunpack.c.l.b16 %v348
        %v593 = vunpack.c.h.b16 %v348
        %v594 = vunpack.c.l.b16 %v349
        %v595 = vunpack.c.h.b16 %v349
        %v596 = vunpack.c.l.b16 %v350
        %v597 = vunpack.c.h.b16 %v350
        %v598 = vunpack.c.l.b16 %v351
        %v599 = vunpack.c.h.b16 %v351
        %v600 = vunpack.c.l.b16 %v352
        %v601 = vunpack.c.h.b16 %v352
        %v602 = vunpack.c.l.b16 %v353
        %v603 = vunpack.c.h.b16 %v353
        %v604 = vunpack.c.l.b16 %v354
        %v605 = vunpack.c.h.b16 %v354
        %v606 = vunpack.c.l.b16 %v355
        %v607 = vunpack.c.h.b16 %v355
        %v608 = vunpack.c.l.b16 %v356
        %v609 = vunpack.c.h.b16 %v356
        %v610 = vunpack.c.l.b16 %v357
        %v611 = vunpack.c.h.b16 %v357
        %v612 = vunpack.c.l.b16 %v358
        %v613 = vunpack.c.h.b16 %v358
        %v614 = vunpack.c.l.b16 %v359
        %v615 = vunpack.c.h.b16 %v359
        %v616 = vunpack.c.l.b16 %v360
        %v617 = vunpack.c.h.b16 %v360
        %v618 = vunpack.c.l.b16 %v361
        %v619 = vunpack.c.h.b16 %v361
        %v620 = vunpack.c.l.b16 %v362
        %v621 = vunpack.c.h.b16 %v362
        %v622 = vunpack.c.l.b16 %v363
        %v623 = vunpack.c.h.b16 %v363
        %v624 = vunpack.c.l.b16 %v364
        %v625 = vunpack.c.h.b16 %v364
        %v626 = vunpack.c.l.b16 %v365
        %v627 = vunpack.c.h.b16 %v365
        %v628 = vunpack.c.l.b16 %v366
        %v629 = vunpack.c.h.b16 %v366
        %v630 = vunpack.c.l.b16 %v367
        %v631 = vunpack.c.h.b16 %v367
        %v632 = vunpack.c.l.b16 %v368
        %v633 = vunpack.c.h.b16 %v368
        %v634 = vunpack.c.l.b16 %v369
        %v635 = vunpack.c.h.b16 %v369
        %v636 = vunpack.c.l.b16 %v370
        %v637 = vunpack.c.h.b16 %v370
        %v638 = vunpack.c.l.b16 %v371
        %v639 = vunpack.c.h.b16 %v371
        %v640 = vunpack.c.l.b16 %v372
        %v641 = vunpack.c.h.b16 %v372
        %v642 = vunpack.c.l.b16 %v373
        %v643 = vunpack.c.h.b16 %v373
        %v644 = vunpack.c.l.b16 %v374
        %v645 = vunpack.c.h.b16 %v374
        %v646 = vunpack.c.l.b16 %v375
        %v647 = vunpack.c.h.b16 %v375
        %v648 = vpack.c.b16 %v524, %v520
        %v649 = vpack.c.b16 %v525, %v521
        %v650 = vpack.c.b16 %v526, %v522
        %v651 = vpack.c.b16 %v527, %v523
        %v652 = vpack.c.b16 %v532, %v528
        %v653 = vpack.c.b16 %v533, %v529
        %v654 = vpack.c.b16 %v534, %v530
        %v655 = vpack.c.b16 %v535, %v531
        %v656 = vpack.c.b16 %v540, %v536
        %v657 = vpack.c.b16 %v541, %v537
        %v658 = vpack.c.b16 %v542, %v538
        %v659 = vpack.c.b16 %v543, %v539
        %v660 = vpack.c.b16 %v548, %v544
        %v661 = vpack.c.b16 %v549, %v545
        %v662 = vpack.c.b16 %v550, %v546
        %v663 = vpack.c.b16 %v551, %v547
        %v664 = vpack.c.b16 %v556, %v552
        %v665 = vpack.c.b16 %v557, %v553
        %v666 = vpack.c.b16 %v558, %v554
        %v667 = vpack.c.b16 %v559, %v555
        %v668 = vpack.c.b16 %v564, %v560
        %v669 = vpack.c.b16 %v565, %v561
        %v670 = vpack.c.b16 %v566, %v562
        %v671 = vpack.c.b16 %v567, %v563
        %v672 = vpack.c.b16 %v572, %v568
        %v673 = vpack.c.b16 %v573, %v569
        %v674 = vpack.c.b16 %v574, %v570
        %v675 = vpack.c.b16 %v575, %v571
        %v676 = vpack.c.b16 %v580, %v576
        %v677 = vpack.c.b16 %v581, %v577
        %v678 = vpack.c.b16 %v582, %v578
        %v679 = vpack.c.b16 %v583, %v579
        %v680 = vpack.c.b16 %v588, %v584
        %v681 = vpack.c.b16 %v589, %v585
        %v682 = vpack.c.b16 %v590, %v586
        %v683 = vpack.c.b16 %v591, %v587
        %v684 = vpack.c.b16 %v596, %v592
        %v685 = vpack.c.b16 %v597, %v593
        %v686 = vpack.c.b16 %v598, %v594
        %v687 = vpack.c.b16 %v599, %v595
        %v688 = vpack.c.b16 %v604, %v600
        %v689 = vpack.c.b16 %v605, %v601
        %v690 = vpack.c.b16 %v606, %v602
        %v691 = vpack.c.b16 %v607, %v603
        %v692 = vpack.c.b16 %v612, %v608
        %v693 = vpack.c.b16 %v613, %v609
        %v694 = vpack.c.b16 %v614, %v610
        %v695 = vpack.c.b16 %v615, %v611
        %v696 = vpack.c.b16 %v620, %v616
        %v697 = vpack.c.b16 %v621, %v617
        %v698 = vpack.c.b16 %v622, %v618
        %v699 = vpack.c.b16 %v623, %v619
        %v700 = vpack.c.b16 %v628, %v624
        %v701 = vpack.c.b16 %v629, %v625
        %v702 = vpack.c.b16 %v630, %v626
        %v703 = vpack.c.b16 %v631, %v627
        %v704 = vpack.c.b16 %v636, %v632
        %v705 = vpack.c.b16 %v637, %v633
        %v706 = vpack.c.b16 %v638, %v634
        %v707 = vpack.c.b16 %v639, %v635
        %v708 = vpack.c.b16 %v644, %v640
        %v709 = vpack.c.b16 %v645, %v641
        %v710 = vpack.c.b16 %v646, %v642
        %v711 = vpack.c.b16 %v647, %v643
        %776 = vmatprep.subr.bf16.mxu0 %v649
        %777 = vmatpush1.bf16.msra.mxu0 %v648
        %778 = vmatprep.subr.bf16.mxu0 %v653
        %779 = vmatpush1.bf16.msra.mxu0 %v652
        %780 = vmatprep.subr.bf16.mxu0 %v657
        %781 = vmatpush1.bf16.msra.mxu0 %v656
        %782 = vmatprep.subr.bf16.mxu0 %v661
        %783 = vmatpush1.bf16.msra.mxu0 %v660
        %784 = vmatprep.subr.bf16.mxu0 %v665
        %785 = vmatpush1.bf16.msra.mxu0 %v664
        %786 = vmatprep.subr.bf16.mxu0 %v669
        %787 = vmatpush1.bf16.msra.mxu0 %v668
        %788 = vmatprep.subr.bf16.mxu0 %v673
        %789 = vmatpush1.bf16.msra.mxu0 %v672
        %790 = vmatprep.subr.bf16.mxu0 %v677
        %791 = vmatpush1.bf16.msra.mxu0 %v676
        %792 = vmatprep.subr.bf16.mxu0 %v681
        %793 = vmatpush1.bf16.msra.mxu0 %v680
        %794 = vmatprep.subr.bf16.mxu0 %v685
        %795 = vmatpush1.bf16.msra.mxu0 %v684
        %796 = vmatprep.subr.bf16.mxu0 %v689
        %797 = vmatpush1.bf16.msra.mxu0 %v688
        %798 = vmatprep.subr.bf16.mxu0 %v693
        %799 = vmatpush1.bf16.msra.mxu0 %v692
        %800 = vmatprep.subr.bf16.mxu0 %v697
        %801 = vmatpush1.bf16.msra.mxu0 %v696
        %802 = vmatprep.subr.bf16.mxu0 %v701
        %803 = vmatpush1.bf16.msra.mxu0 %v700
        %804 = vmatprep.subr.bf16.mxu0 %v705
        %805 = vmatpush1.bf16.msra.mxu0 %v704
        %806 = vmatprep.subr.bf16.mxu0 %v709
        %807 = vmatpush1.bf16.msra.mxu0 %v708
        %808 = vmatprep.mubr.bf16.mxu0 %v425
        %809 = vmatmul.mubr.bf16.gmra.mrb[0].mxu0 %v424
        %v810 = vpop.f32.mrb[0].mxu0
        %v811 = vadd.f32 0.0, %v810
        %v812 = vpop.f32.mrb[0].mxu0
        %v813 = vadd.f32 0.0, %v812
        %v814 = vpop.f32.mrb[0].mxu0
        %v815 = vadd.f32 0.0, %v814
        %v816 = vpop.f32.mrb[0].mxu0
        %v817 = vadd.f32 0.0, %v816
        %818 = vmatprep.mubr.bf16.mxu0 %v427
        %819 = vmatmul.mubr.bf16.gmra.mrb[0].mxu0 %v426
        %v820 = vpop.f32.mrb[0].mxu0
        %v821 = vadd.f32 0.0, %v820
        %v822 = vpop.f32.mrb[0].mxu0
        %v823 = vadd.f32 0.0, %v822
        %v824 = vpop.f32.mrb[0].mxu0
        %v825 = vadd.f32 0.0, %v824
        %v826 = vpop.f32.mrb[0].mxu0
        %v827 = vadd.f32 0.0, %v826
        %828 = vmatprep.mubr.bf16.mxu0 %v429
        %829 = vmatmul.mubr.bf16.gmra.mrb[0].mxu0 %v428
        %v830 = vpop.f32.mrb[0].mxu0
        %v831 = vadd.f32 0.0, %v830
        %v832 = vpop.f32.mrb[0].mxu0
        %v833 = vadd.f32 0.0, %v832
        %v834 = vpop.f32.mrb[0].mxu0
        %v835 = vadd.f32 0.0, %v834
        %v836 = vpop.f32.mrb[0].mxu0
        %v837 = vadd.f32 0.0, %v836
        %838 = vmatprep.mubr.bf16.mxu0 %v431
        %839 = vmatmul.mubr.bf16.gmra.mrb[0].mxu0 %v430
        %v840 = vpop.f32.mrb[0].mxu0
        %v841 = vadd.f32 0.0, %v840
        %v842 = vpop.f32.mrb[0].mxu0
        %v843 = vadd.f32 0.0, %v842
        %v844 = vpop.f32.mrb[0].mxu0
        %v845 = vadd.f32 0.0, %v844
        %v846 = vpop.f32.mrb[0].mxu0
        %v847 = vadd.f32 0.0, %v846
        %848 = vmatprep.mubr.bf16.mxu0 %v433
        %849 = vmatmul.mubr.bf16.gmra.mrb[0].mxu0 %v432
        %v850 = vpop.f32.mrb[0].mxu0
        %v851 = vadd.f32 0.0, %v850
        %v852 = vpop.f32.mrb[0].mxu0
        %v853 = vadd.f32 0.0, %v852
        %v854 = vpop.f32.mrb[0].mxu0
        %v855 = vadd.f32 0.0, %v854
        %v856 = vpop.f32.mrb[0].mxu0
        %v857 = vadd.f32 0.0, %v856
        %858 = vmatprep.mubr.bf16.mxu0 %v435
        %859 = vmatmul.mubr.bf16.gmra.mrb[0].mxu0 %v434
        %v860 = vpop.f32.mrb[0].mxu0
        %v861 = vadd.f32 0.0, %v860
        %v862 = vpop.f32.mrb[0].mxu0
        %v863 = vadd.f32 0.0, %v862
        %v864 = vpop.f32.mrb[0].mxu0
        %v865 = vadd.f32 0.0, %v864
        %v866 = vpop.f32.mrb[0].mxu0
        %v867 = vadd.f32 0.0, %v866
        %868 = vmatprep.mubr.bf16.mxu0 %v437
        %869 = vmatmul.mubr.bf16.gmra.mrb[0].mxu0 %v436
        %v870 = vpop.f32.mrb[0].mxu0
        %v871 = vadd.f32 0.0, %v870
        %v872 = vpop.f32.mrb[0].mxu0
        %v873 = vadd.f32 0.0, %v872
        %v874 = vpop.f32.mrb[0].mxu0
        %v875 = vadd.f32 0.0, %v874
        %v876 = vpop.f32.mrb[0].mxu0
        %v877 = vadd.f32 0.0, %v876
        %878 = vmatprep.mubr.bf16.mxu0 %v439
        %879 = vmatmul.mubr.bf16.gmra.mrb[0].mxu0 %v438
        %v880 = vpop.f32.mrb[0].mxu0
        %v881 = vadd.f32 0.0, %v880
        %v882 = vpop.f32.mrb[0].mxu0
        %v883 = vadd.f32 0.0, %v882
        %v884 = vpop.f32.mrb[0].mxu0
        %v885 = vadd.f32 0.0, %v884
        %v886 = vpop.f32.mrb[0].mxu0
        %v887 = vadd.f32 0.0, %v886
        %888 = vdwg.mxu0
        %889 = vmatprep.subr.bf16.mxu0 %v651
        %890 = vmatpush1.bf16.msra.mxu0 %v650
        %891 = vmatprep.subr.bf16.mxu0 %v655
        %892 = vmatpush1.bf16.msra.mxu0 %v654
        %893 = vmatprep.subr.bf16.mxu0 %v659
        %894 = vmatpush1.bf16.msra.mxu0 %v658
        %895 = vmatprep.subr.bf16.mxu0 %v663
        %896 = vmatpush1.bf16.msra.mxu0 %v662
        %897 = vmatprep.subr.bf16.mxu0 %v667
        %898 = vmatpush1.bf16.msra.mxu0 %v666
        %899 = vmatprep.subr.bf16.mxu0 %v671
        %900 = vmatpush1.bf16.msra.mxu0 %v670
        %901 = vmatprep.subr.bf16.mxu0 %v675
        %902 = vmatpush1.bf16.msra.mxu0 %v674
        %903 = vmatprep.subr.bf16.mxu0 %v679
        %904 = vmatpush1.bf16.msra.mxu0 %v678
        %905 = vmatprep.subr.bf16.mxu0 %v683
        %906 = vmatpush1.bf16.msra.mxu0 %v682
        %907 = vmatprep.subr.bf16.mxu0 %v687
        %908 = vmatpush1.bf16.msra.mxu0 %v686
        %909 = vmatprep.subr.bf16.mxu0 %v691
        %910 = vmatpush1.bf16.msra.mxu0 %v690
        %911 = vmatprep.subr.bf16.mxu0 %v695
        %912 = vmatpush1.bf16.msra.mxu0 %v694
        %913 = vmatprep.subr.bf16.mxu0 %v699
        %914 = vmatpush1.bf16.msra.mxu0 %v698
        %915 = vmatprep.subr.bf16.mxu0 %v703
        %916 = vmatpush1.bf16.msra.mxu0 %v702
        %917 = vmatprep.subr.bf16.mxu0 %v707
        %918 = vmatpush1.bf16.msra.mxu0 %v706
        %919 = vmatprep.subr.bf16.mxu0 %v711
        %920 = vmatpush1.bf16.msra.mxu0 %v710
        %921 = vmatprep.mubr.bf16.mxu0 %v425
        %922 = vmatmul.mubr.bf16.gmra.mrb[0].mxu0 %v424
        %v923 = vpop.f32.mrb[0].mxu0
        %v924 = vadd.f32 0.0, %v923
        %v925 = vpop.f32.mrb[0].mxu0
        %v926 = vadd.f32 0.0, %v925
        %v927 = vpop.f32.mrb[0].mxu0
        %v928 = vadd.f32 0.0, %v927
        %v929 = vpop.f32.mrb[0].mxu0
        %v930 = vadd.f32 0.0, %v929
        %931 = vmatprep.mubr.bf16.mxu0 %v427
        %932 = vmatmul.mubr.bf16.gmra.mrb[0].mxu0 %v426
        %v933 = vpop.f32.mrb[0].mxu0
        %v934 = vadd.f32 0.0, %v933
        %v935 = vpop.f32.mrb[0].mxu0
        %v936 = vadd.f32 0.0, %v935
        %v937 = vpop.f32.mrb[0].mxu0
        %v938 = vadd.f32 0.0, %v937
        %v939 = vpop.f32.mrb[0].mxu0
        %v940 = vadd.f32 0.0, %v939
        %941 = vmatprep.mubr.bf16.mxu0 %v429
        %942 = vmatmul.mubr.bf16.gmra.mrb[0].mxu0 %v428
        %v943 = vpop.f32.mrb[0].mxu0
        %v944 = vadd.f32 0.0, %v943
        %v945 = vpop.f32.mrb[0].mxu0
        %v946 = vadd.f32 0.0, %v945
        %v947 = vpop.f32.mrb[0].mxu0
        %v948 = vadd.f32 0.0, %v947
        %v949 = vpop.f32.mrb[0].mxu0
        %v950 = vadd.f32 0.0, %v949
        %951 = vmatprep.mubr.bf16.mxu0 %v431
        %952 = vmatmul.mubr.bf16.gmra.mrb[0].mxu0 %v430
        %v953 = vpop.f32.mrb[0].mxu0
        %v954 = vadd.f32 0.0, %v953
        %v955 = vpop.f32.mrb[0].mxu0
        %v956 = vadd.f32 0.0, %v955
        %v957 = vpop.f32.mrb[0].mxu0
        %v958 = vadd.f32 0.0, %v957
        %v959 = vpop.f32.mrb[0].mxu0
        %v960 = vadd.f32 0.0, %v959
        %961 = vmatprep.mubr.bf16.mxu0 %v433
        %962 = vmatmul.mubr.bf16.gmra.mrb[0].mxu0 %v432
        %v963 = vpop.f32.mrb[0].mxu0
        %v964 = vadd.f32 0.0, %v963
        %v965 = vpop.f32.mrb[0].mxu0
        %v966 = vadd.f32 0.0, %v965
        %v967 = vpop.f32.mrb[0].mxu0
        %v968 = vadd.f32 0.0, %v967
        %v969 = vpop.f32.mrb[0].mxu0
        %v970 = vadd.f32 0.0, %v969
        %971 = vmatprep.mubr.bf16.mxu0 %v435
        %972 = vmatmul.mubr.bf16.gmra.mrb[0].mxu0 %v434
        %v973 = vpop.f32.mrb[0].mxu0
        %v974 = vadd.f32 0.0, %v973
        %v975 = vpop.f32.mrb[0].mxu0
        %v976 = vadd.f32 0.0, %v975
        %v977 = vpop.f32.mrb[0].mxu0
        %v978 = vadd.f32 0.0, %v977
        %v979 = vpop.f32.mrb[0].mxu0
        %v980 = vadd.f32 0.0, %v979
        %981 = vmatprep.mubr.bf16.mxu0 %v437
        %982 = vmatmul.mubr.bf16.gmra.mrb[0].mxu0 %v436
        %v983 = vpop.f32.mrb[0].mxu0
        %v984 = vadd.f32 0.0, %v983
        %v985 = vpop.f32.mrb[0].mxu0
        %v986 = vadd.f32 0.0, %v985
        %v987 = vpop.f32.mrb[0].mxu0
        %v988 = vadd.f32 0.0, %v987
        %v989 = vpop.f32.mrb[0].mxu0
        %v990 = vadd.f32 0.0, %v989
        %991 = vmatprep.mubr.bf16.mxu0 %v439
        %992 = vmatmul.mubr.bf16.gmra.mrb[0].mxu0 %v438
        %v993 = vpop.f32.mrb[0].mxu0
        %v994 = vadd.f32 0.0, %v993
        %v995 = vpop.f32.mrb[0].mxu0
        %v996 = vadd.f32 0.0, %v995
        %v997 = vpop.f32.mrb[0].mxu0
        %v998 = vadd.f32 0.0, %v997
        %v999 = vpop.f32.mrb[0].mxu0
        %v1000 = vadd.f32 0.0, %v999
        %1001 = vdwg.mxu0
        %v1002 = vxor.u32 %v811, 2147483648
        %v1003 = vxor.u32 %v813, 2147483648
        %v1004 = vxor.u32 %v815, 2147483648
        %v1005 = vxor.u32 %v817, 2147483648
        %v1006 = vxor.u32 %v821, 2147483648
        %v1007 = vxor.u32 %v823, 2147483648
        %v1008 = vxor.u32 %v825, 2147483648
        %v1009 = vxor.u32 %v827, 2147483648
        %v1010 = vxor.u32 %v831, 2147483648
        %v1011 = vxor.u32 %v833, 2147483648
        %v1012 = vxor.u32 %v835, 2147483648
        %v1013 = vxor.u32 %v837, 2147483648
        %v1014 = vxor.u32 %v841, 2147483648
        %v1015 = vxor.u32 %v843, 2147483648
        %v1016 = vxor.u32 %v845, 2147483648
        %v1017 = vxor.u32 %v847, 2147483648
        %v1018 = vxor.u32 %v851, 2147483648
        %v1019 = vxor.u32 %v853, 2147483648
        %v1020 = vxor.u32 %v855, 2147483648
        %v1021 = vxor.u32 %v857, 2147483648
        %v1022 = vxor.u32 %v861, 2147483648
        %v1023 = vxor.u32 %v863, 2147483648
        %v1024 = vxor.u32 %v865, 2147483648
        %v1025 = vxor.u32 %v867, 2147483648
        %v1026 = vxor.u32 %v871, 2147483648
        %v1027 = vxor.u32 %v873, 2147483648
        %v1028 = vxor.u32 %v875, 2147483648
        %v1029 = vxor.u32 %v877, 2147483648
        %v1030 = vxor.u32 %v881, 2147483648
        %v1031 = vxor.u32 %v883, 2147483648
        %v1032 = vxor.u32 %v885, 2147483648
        %v1033 = vxor.u32 %v887, 2147483648
        %v1034 = vmul.f32 %v1002, 1.442695
        %v1035 = vpow.pop %v1034
        %v1036 = vmul.f32 %v1003, 1.442695
        %v1037 = vpow.pop %v1036
        %v1038 = vmul.f32 %v1004, 1.442695
        %v1039 = vpow.pop %v1038
        %v1040 = vmul.f32 %v1005, 1.442695
        %v1041 = vpow.pop %v1040
        %v1042 = vmul.f32 %v1006, 1.442695
        %v1043 = vpow.pop %v1042
        %v1044 = vmul.f32 %v1007, 1.442695
        %v1045 = vpow.pop %v1044
        %v1046 = vmul.f32 %v1008, 1.442695
        %v1047 = vpow.pop %v1046
        %v1048 = vmul.f32 %v1009, 1.442695
        %v1049 = vpow.pop %v1048
        %v1050 = vmul.f32 %v1010, 1.442695
        %v1051 = vpow.pop %v1050
        %v1052 = vmul.f32 %v1011, 1.442695
        %v1053 = vpow.pop %v1052
        %v1054 = vmul.f32 %v1012, 1.442695
        %v1055 = vpow.pop %v1054
        %v1056 = vmul.f32 %v1013, 1.442695
        %v1057 = vpow.pop %v1056
        %v1058 = vmul.f32 %v1014, 1.442695
        %v1059 = vpow.pop %v1058
        %v1060 = vmul.f32 %v1015, 1.442695
        %v1061 = vpow.pop %v1060
        %v1062 = vmul.f32 %v1016, 1.442695
        %v1063 = vpow.pop %v1062
        %v1064 = vmul.f32 %v1017, 1.442695
        %v1065 = vpow.pop %v1064
        %v1066 = vmul.f32 %v1018, 1.442695
        %v1067 = vpow.pop %v1066
        %v1068 = vmul.f32 %v1019, 1.442695
        %v1069 = vpow.pop %v1068
        %v1070 = vmul.f32 %v1020, 1.442695
        %v1071 = vpow.pop %v1070
        %v1072 = vmul.f32 %v1021, 1.442695
        %v1073 = vpow.pop %v1072
        %v1074 = vmul.f32 %v1022, 1.442695
        %v1075 = vpow.pop %v1074
        %v1076 = vmul.f32 %v1023, 1.442695
        %v1077 = vpow.pop %v1076
        %v1078 = vmul.f32 %v1024, 1.442695
        %v1079 = vpow.pop %v1078
        %v1080 = vmul.f32 %v1025, 1.442695
        %v1081 = vpow.pop %v1080
        %v1082 = vmul.f32 %v1026, 1.442695
        %v1083 = vpow.pop %v1082
        %v1084 = vmul.f32 %v1027, 1.442695
        %v1085 = vpow.pop %v1084
        %v1086 = vmul.f32 %v1028, 1.442695
        %v1087 = vpow.pop %v1086
        %v1088 = vmul.f32 %v1029, 1.442695
        %v1089 = vpow.pop %v1088
        %v1090 = vmul.f32 %v1030, 1.442695
        %v1091 = vpow.pop %v1090
        %v1092 = vmul.f32 %v1031, 1.442695
        %v1093 = vpow.pop %v1092
        %v1094 = vmul.f32 %v1032, 1.442695
        %v1095 = vpow.pop %v1094
        %v1096 = vmul.f32 %v1033, 1.442695
        %v1097 = vpow.pop %v1096
        %v1098 = vadd.f32 %v1035, 1.0
        %v1099 = vadd.f32 %v1037, 1.0
        %v1100 = vadd.f32 %v1039, 1.0
        %v1101 = vadd.f32 %v1041, 1.0
        %v1102 = vadd.f32 %v1043, 1.0
        %v1103 = vadd.f32 %v1045, 1.0
        %v1104 = vadd.f32 %v1047, 1.0
        %v1105 = vadd.f32 %v1049, 1.0
        %v1106 = vadd.f32 %v1051, 1.0
        %v1107 = vadd.f32 %v1053, 1.0
        %v1108 = vadd.f32 %v1055, 1.0
        %v1109 = vadd.f32 %v1057, 1.0
        %v1110 = vadd.f32 %v1059, 1.0
        %v1111 = vadd.f32 %v1061, 1.0
        %v1112 = vadd.f32 %v1063, 1.0
        %v1113 = vadd.f32 %v1065, 1.0
        %v1114 = vadd.f32 %v1067, 1.0
        %v1115 = vadd.f32 %v1069, 1.0
        %v1116 = vadd.f32 %v1071, 1.0
        %v1117 = vadd.f32 %v1073, 1.0
        %v1118 = vadd.f32 %v1075, 1.0
        %v1119 = vadd.f32 %v1077, 1.0
        %v1120 = vadd.f32 %v1079, 1.0
        %v1121 = vadd.f32 %v1081, 1.0
        %v1122 = vadd.f32 %v1083, 1.0
        %v1123 = vadd.f32 %v1085, 1.0
        %v1124 = vadd.f32 %v1087, 1.0
        %v1125 = vadd.f32 %v1089, 1.0
        %v1126 = vadd.f32 %v1091, 1.0
        %v1127 = vadd.f32 %v1093, 1.0
        %v1128 = vadd.f32 %v1095, 1.0
        %v1129 = vadd.f32 %v1097, 1.0
        %v1130 = vrcp.pop %v1098
        %v1131 = vmul.f32 1.0, %v1130
        %v1132 = vrcp.pop %v1099
        %v1133 = vmul.f32 1.0, %v1132
        %v1134 = vrcp.pop %v1100
        %v1135 = vmul.f32 1.0, %v1134
        %v1136 = vrcp.pop %v1101
        %v1137 = vmul.f32 1.0, %v1136
        %v1138 = vrcp.pop %v1102
        %v1139 = vmul.f32 1.0, %v1138
        %v1140 = vrcp.pop %v1103
        %v1141 = vmul.f32 1.0, %v1140
        %v1142 = vrcp.pop %v1104
        %v1143 = vmul.f32 1.0, %v1142
        %v1144 = vrcp.pop %v1105
        %v1145 = vmul.f32 1.0, %v1144
        %v1146 = vrcp.pop %v1106
        %v1147 = vmul.f32 1.0, %v1146
        %v1148 = vrcp.pop %v1107
        %v1149 = vmul.f32 1.0, %v1148
        %v1150 = vrcp.pop %v1108
        %v1151 = vmul.f32 1.0, %v1150
        %v1152 = vrcp.pop %v1109
        %v1153 = vmul.f32 1.0, %v1152
        %v1154 = vrcp.pop %v1110
        %v1155 = vmul.f32 1.0, %v1154
        %v1156 = vrcp.pop %v1111
        %v1157 = vmul.f32 1.0, %v1156
        %v1158 = vrcp.pop %v1112
        %v1159 = vmul.f32 1.0, %v1158
        %v1160 = vrcp.pop %v1113
        %v1161 = vmul.f32 1.0, %v1160
        %v1162 = vrcp.pop %v1114
        %v1163 = vmul.f32 1.0, %v1162
        %v1164 = vrcp.pop %v1115
        %v1165 = vmul.f32 1.0, %v1164
        %v1166 = vrcp.pop %v1116
        %v1167 = vmul.f32 1.0, %v1166
        %v1168 = vrcp.pop %v1117
        %v1169 = vmul.f32 1.0, %v1168
        %v1170 = vrcp.pop %v1118
        %v1171 = vmul.f32 1.0, %v1170
        %v1172 = vrcp.pop %v1119
        %v1173 = vmul.f32 1.0, %v1172
        %v1174 = vrcp.pop %v1120
        %v1175 = vmul.f32 1.0, %v1174
        %v1176 = vrcp.pop %v1121
        %v1177 = vmul.f32 1.0, %v1176
        %v1178 = vrcp.pop %v1122
        %v1179 = vmul.f32 1.0, %v1178
        %v1180 = vrcp.pop %v1123
        %v1181 = vmul.f32 1.0, %v1180
        %v1182 = vrcp.pop %v1124
        %v1183 = vmul.f32 1.0, %v1182
        %v1184 = vrcp.pop %v1125
        %v1185 = vmul.f32 1.0, %v1184
        %v1186 = vrcp.pop %v1126
        %v1187 = vmul.f32 1.0, %v1186
        %v1188 = vrcp.pop %v1127
        %v1189 = vmul.f32 1.0, %v1188
        %v1190 = vrcp.pop %v1128
        %v1191 = vmul.f32 1.0, %v1190
        %v1192 = vrcp.pop %v1129
        %v1193 = vmul.f32 1.0, %v1192
        %v1194 = vmul.f32 %v811, %v1131
        %v1195 = vmul.f32 %v813, %v1133
        %v1196 = vmul.f32 %v815, %v1135
        %v1197 = vmul.f32 %v817, %v1137
        %v1198 = vmul.f32 %v821, %v1139
        %v1199 = vmul.f32 %v823, %v1141
        %v1200 = vmul.f32 %v825, %v1143
        %v1201 = vmul.f32 %v827, %v1145
        %v1202 = vmul.f32 %v831, %v1147
        %v1203 = vmul.f32 %v833, %v1149
        %v1204 = vmul.f32 %v835, %v1151
        %v1205 = vmul.f32 %v837, %v1153
        %v1206 = vmul.f32 %v841, %v1155
        %v1207 = vmul.f32 %v843, %v1157
        %v1208 = vmul.f32 %v845, %v1159
        %v1209 = vmul.f32 %v847, %v1161
        %v1210 = vmul.f32 %v851, %v1163
        %v1211 = vmul.f32 %v853, %v1165
        %v1212 = vmul.f32 %v855, %v1167
        %v1213 = vmul.f32 %v857, %v1169
        %v1214 = vmul.f32 %v861, %v1171
        %v1215 = vmul.f32 %v863, %v1173
        %v1216 = vmul.f32 %v865, %v1175
        %v1217 = vmul.f32 %v867, %v1177
        %v1218 = vmul.f32 %v871, %v1179
        %v1219 = vmul.f32 %v873, %v1181
        %v1220 = vmul.f32 %v875, %v1183
        %v1221 = vmul.f32 %v877, %v1185
        %v1222 = vmul.f32 %v881, %v1187
        %v1223 = vmul.f32 %v883, %v1189
        %v1224 = vmul.f32 %v885, %v1191
        %v1225 = vmul.f32 %v887, %v1193
        %v1226 = vmul.f32 %v1194, %v924
        %v1227 = vmul.f32 %v1195, %v926
        %v1228 = vmul.f32 %v1196, %v928
        %v1229 = vmul.f32 %v1197, %v930
        %v1230 = vmul.f32 %v1198, %v934
        %v1231 = vmul.f32 %v1199, %v936
        %v1232 = vmul.f32 %v1200, %v938
        %v1233 = vmul.f32 %v1201, %v940
        %v1234 = vmul.f32 %v1202, %v944
        %v1235 = vmul.f32 %v1203, %v946
        %v1236 = vmul.f32 %v1204, %v948
        %v1237 = vmul.f32 %v1205, %v950
        %v1238 = vmul.f32 %v1206, %v954
        %v1239 = vmul.f32 %v1207, %v956
        %v1240 = vmul.f32 %v1208, %v958
        %v1241 = vmul.f32 %v1209, %v960
        %v1242 = vmul.f32 %v1210, %v964
        %v1243 = vmul.f32 %v1211, %v966
        %v1244 = vmul.f32 %v1212, %v968
        %v1245 = vmul.f32 %v1213, %v970
        %v1246 = vmul.f32 %v1214, %v974
        %v1247 = vmul.f32 %v1215, %v976
        %v1248 = vmul.f32 %v1216, %v978
        %v1249 = vmul.f32 %v1217, %v980
        %v1250 = vmul.f32 %v1218, %v984
        %v1251 = vmul.f32 %v1219, %v986
        %v1252 = vmul.f32 %v1220, %v988
        %v1253 = vmul.f32 %v1221, %v990
        %v1254 = vmul.f32 %v1222, %v994
        %v1255 = vmul.f32 %v1223, %v996
        %v1256 = vmul.f32 %v1224, %v998
        %v1257 = vmul.f32 %v1225, %v1000
        %v1258 = vld [vmem:[#allocation2] sm:$0xff]
        %v1259 = vld [vmem:[#allocation2 + $0x8] sm:$0xff]
        %v1260 = vld [vmem:[#allocation2 + $0x10] sm:$0xff]
        %v1261 = vld [vmem:[#allocation2 + $0x18] sm:$0xff]
        %v1262 = vld [vmem:[#allocation2 + $0x20] sm:$0xff]
        %v1263 = vld [vmem:[#allocation2 + $0x28] sm:$0xff]
        %v1264 = vld [vmem:[#allocation2 + $0x30] sm:$0xff]
        %v1265 = vld [vmem:[#allocation2 + $0x38] sm:$0xff]
        %v1266 = vld [vmem:[#allocation2 + $0x40] sm:$0xff]
        %v1267 = vld [vmem:[#allocation2 + $0x48] sm:$0xff]
        %v1268 = vld [vmem:[#allocation2 + $0x50] sm:$0xff]
        %v1269 = vld [vmem:[#allocation2 + $0x58] sm:$0xff]
        %v1270 = vld [vmem:[#allocation2 + $0x60] sm:$0xff]
        %v1271 = vld [vmem:[#allocation2 + $0x68] sm:$0xff]
        %v1272 = vld [vmem:[#allocation2 + $0x70] sm:$0xff]
        %v1273 = vld [vmem:[#allocation2 + $0x78] sm:$0xff]
        %v1274 = vld [vmem:[#allocation2 + $0x80] sm:$0xff]
        %v1275 = vld [vmem:[#allocation2 + $0x88] sm:$0xff]
        %v1276 = vld [vmem:[#allocation2 + $0x90] sm:$0xff]
        %v1277 = vld [vmem:[#allocation2 + $0x98] sm:$0xff]
        %v1278 = vld [vmem:[#allocation2 + $0xa0] sm:$0xff]
        %v1279 = vld [vmem:[#allocation2 + $0xa8] sm:$0xff]
        %v1280 = vld [vmem:[#allocation2 + $0xb0] sm:$0xff]
        %v1281 = vld [vmem:[#allocation2 + $0xb8] sm:$0xff]
        %v1282 = vld [vmem:[#allocation2 + $0xc0] sm:$0xff]
        %v1283 = vld [vmem:[#allocation2 + $0xc8] sm:$0xff]
        %v1284 = vld [vmem:[#allocation2 + $0xd0] sm:$0xff]
        %v1285 = vld [vmem:[#allocation2 + $0xd8] sm:$0xff]
        %v1286 = vld [vmem:[#allocation2 + $0xe0] sm:$0xff]
        %v1287 = vld [vmem:[#allocation2 + $0xe8] sm:$0xff]
        %v1288 = vld [vmem:[#allocation2 + $0xf0] sm:$0xff]
        %v1289 = vld [vmem:[#allocation2 + $0xf8] sm:$0xff]
        %v1290 = vpack.c.bf16 %v1228, %v1226
        %v1291 = vpack.c.bf16 %v1229, %v1227
        %v1292 = vpack.c.bf16 %v1232, %v1230
        %v1293 = vpack.c.bf16 %v1233, %v1231
        %v1294 = vpack.c.bf16 %v1236, %v1234
        %v1295 = vpack.c.bf16 %v1237, %v1235
        %v1296 = vpack.c.bf16 %v1240, %v1238
        %v1297 = vpack.c.bf16 %v1241, %v1239
        %v1298 = vpack.c.bf16 %v1244, %v1242
        %v1299 = vpack.c.bf16 %v1245, %v1243
        %v1300 = vpack.c.bf16 %v1248, %v1246
        %v1301 = vpack.c.bf16 %v1249, %v1247
        %v1302 = vpack.c.bf16 %v1252, %v1250
        %v1303 = vpack.c.bf16 %v1253, %v1251
        %v1304 = vpack.c.bf16 %v1256, %v1254
        %v1305 = vpack.c.bf16 %v1257, %v1255
        %v1306 = vld [vmem:[%s233] sm:$0xff]
        %v1307 = vld [vmem:[%s233 + $0x8] sm:$0xff]
        %v1308 = vld [vmem:[%s233 + $0x10] sm:$0xff]
        %v1309 = vld [vmem:[%s233 + $0x18] sm:$0xff]
        %v1310 = vld [vmem:[%s233 + $0x20] sm:$0xff]
        %v1311 = vld [vmem:[%s233 + $0x28] sm:$0xff]
        %v1312 = vld [vmem:[%s233 + $0x30] sm:$0xff]
        %v1313 = vld [vmem:[%s233 + $0x38] sm:$0xff]
        %v1314 = vld [vmem:[%s233 + $0x40] sm:$0xff]
        %v1315 = vld [vmem:[%s233 + $0x48] sm:$0xff]
        %v1316 = vld [vmem:[%s233 + $0x50] sm:$0xff]
        %v1317 = vld [vmem:[%s233 + $0x58] sm:$0xff]
        %v1318 = vld [vmem:[%s233 + $0x60] sm:$0xff]
        %v1319 = vld [vmem:[%s233 + $0x68] sm:$0xff]
        %v1320 = vld [vmem:[%s233 + $0x70] sm:$0xff]
        %v1321 = vld [vmem:[%s233 + $0x78] sm:$0xff]
        %v1322 = vld [vmem:[%s233 + $0x80] sm:$0xff]
        %v1323 = vld [vmem:[%s233 + $0x88] sm:$0xff]
        %v1324 = vld [vmem:[%s233 + $0x90] sm:$0xff]
        %v1325 = vld [vmem:[%s233 + $0x98] sm:$0xff]
        %v1326 = vld [vmem:[%s233 + $0xa0] sm:$0xff]
        %v1327 = vld [vmem:[%s233 + $0xa8] sm:$0xff]
        %v1328 = vld [vmem:[%s233 + $0xb0] sm:$0xff]
        %v1329 = vld [vmem:[%s233 + $0xb8] sm:$0xff]
        %v1330 = vld [vmem:[%s233 + $0xc0] sm:$0xff]
        %v1331 = vld [vmem:[%s233 + $0xc8] sm:$0xff]
        %v1332 = vld [vmem:[%s233 + $0xd0] sm:$0xff]
        %v1333 = vld [vmem:[%s233 + $0xd8] sm:$0xff]
        %v1334 = vld [vmem:[%s233 + $0xe0] sm:$0xff]
        %v1335 = vld [vmem:[%s233 + $0xe8] sm:$0xff]
        %v1336 = vld [vmem:[%s233 + $0xf0] sm:$0xff]
        %v1337 = vld [vmem:[%s233 + $0xf8] sm:$0xff]
        %v1370 = vunpack.c.l.b16 %v1306
        %v1371 = vunpack.c.h.b16 %v1306
        %v1372 = vunpack.c.l.b16 %v1307
        %v1373 = vunpack.c.h.b16 %v1307
        %v1374 = vunpack.c.l.b16 %v1308
        %v1375 = vunpack.c.h.b16 %v1308
        %v1376 = vunpack.c.l.b16 %v1309
        %v1377 = vunpack.c.h.b16 %v1309
        %v1378 = vunpack.c.l.b16 %v1310
        %v1379 = vunpack.c.h.b16 %v1310
        %v1380 = vunpack.c.l.b16 %v1311
        %v1381 = vunpack.c.h.b16 %v1311
        %v1382 = vunpack.c.l.b16 %v1312
        %v1383 = vunpack.c.h.b16 %v1312
        %v1384 = vunpack.c.l.b16 %v1313
        %v1385 = vunpack.c.h.b16 %v1313
        %v1386 = vunpack.c.l.b16 %v1314
        %v1387 = vunpack.c.h.b16 %v1314
        %v1388 = vunpack.c.l.b16 %v1315
        %v1389 = vunpack.c.h.b16 %v1315
        %v1390 = vunpack.c.l.b16 %v1316
        %v1391 = vunpack.c.h.b16 %v1316
        %v1392 = vunpack.c.l.b16 %v1317
        %v1393 = vunpack.c.h.b16 %v1317
        %v1394 = vunpack.c.l.b16 %v1318
        %v1395 = vunpack.c.h.b16 %v1318
        %v1396 = vunpack.c.l.b16 %v1319
        %v1397 = vunpack.c.h.b16 %v1319
        %v1398 = vunpack.c.l.b16 %v1320
        %v1399 = vunpack.c.h.b16 %v1320
        %v1400 = vunpack.c.l.b16 %v1321
        %v1401 = vunpack.c.h.b16 %v1321
        %v1402 = vunpack.c.l.b16 %v1322
        %v1403 = vunpack.c.h.b16 %v1322
        %v1404 = vunpack.c.l.b16 %v1323
        %v1405 = vunpack.c.h.b16 %v1323
        %v1406 = vunpack.c.l.b16 %v1324
        %v1407 = vunpack.c.h.b16 %v1324
        %v1408 = vunpack.c.l.b16 %v1325
        %v1409 = vunpack.c.h.b16 %v1325
        %v1410 = vunpack.c.l.b16 %v1326
        %v1411 = vunpack.c.h.b16 %v1326
        %v1412 = vunpack.c.l.b16 %v1327
        %v1413 = vunpack.c.h.b16 %v1327
        %v1414 = vunpack.c.l.b16 %v1328
        %v1415 = vunpack.c.h.b16 %v1328
        %v1416 = vunpack.c.l.b16 %v1329
        %v1417 = vunpack.c.h.b16 %v1329
        %v1418 = vunpack.c.l.b16 %v1330
        %v1419 = vunpack.c.h.b16 %v1330
        %v1420 = vunpack.c.l.b16 %v1331
        %v1421 = vunpack.c.h.b16 %v1331
        %v1422 = vunpack.c.l.b16 %v1332
        %v1423 = vunpack.c.h.b16 %v1332
        %v1424 = vunpack.c.l.b16 %v1333
        %v1425 = vunpack.c.h.b16 %v1333
        %v1426 = vunpack.c.l.b16 %v1334
        %v1427 = vunpack.c.h.b16 %v1334
        %v1428 = vunpack.c.l.b16 %v1335
        %v1429 = vunpack.c.h.b16 %v1335
        %v1430 = vunpack.c.l.b16 %v1336
        %v1431 = vunpack.c.h.b16 %v1336
        %v1432 = vunpack.c.l.b16 %v1337
        %v1433 = vunpack.c.h.b16 %v1337
        %v1434 = vpack.c.b16 %v1372, %v1370
        %v1435 = vpack.c.b16 %v1373, %v1371
        %v1436 = vpack.c.b16 %v1376, %v1374
        %v1437 = vpack.c.b16 %v1377, %v1375
        %v1438 = vpack.c.b16 %v1380, %v1378
        %v1439 = vpack.c.b16 %v1381, %v1379
        %v1440 = vpack.c.b16 %v1384, %v1382
        %v1441 = vpack.c.b16 %v1385, %v1383
        %v1442 = vpack.c.b16 %v1388, %v1386
        %v1443 = vpack.c.b16 %v1389, %v1387
        %v1444 = vpack.c.b16 %v1392, %v1390
        %v1445 = vpack.c.b16 %v1393, %v1391
        %v1446 = vpack.c.b16 %v1396, %v1394
        %v1447 = vpack.c.b16 %v1397, %v1395
        %v1448 = vpack.c.b16 %v1400, %v1398
        %v1449 = vpack.c.b16 %v1401, %v1399
        %v1450 = vpack.c.b16 %v1404, %v1402
        %v1451 = vpack.c.b16 %v1405, %v1403
        %v1452 = vpack.c.b16 %v1408, %v1406
        %v1453 = vpack.c.b16 %v1409, %v1407
        %v1454 = vpack.c.b16 %v1412, %v1410
        %v1455 = vpack.c.b16 %v1413, %v1411
        %v1456 = vpack.c.b16 %v1416, %v1414
        %v1457 = vpack.c.b16 %v1417, %v1415
        %v1458 = vpack.c.b16 %v1420, %v1418
        %v1459 = vpack.c.b16 %v1421, %v1419
        %v1460 = vpack.c.b16 %v1424, %v1422
        %v1461 = vpack.c.b16 %v1425, %v1423
        %v1462 = vpack.c.b16 %v1428, %v1426
        %v1463 = vpack.c.b16 %v1429, %v1427
        %v1464 = vpack.c.b16 %v1432, %v1430
        %v1465 = vpack.c.b16 %v1433, %v1431
        %1498 = vmatprep.subr.bf16.mxu0 %v1435
        %1499 = vmatpush1.bf16.msra.mxu0 %v1434
        %1500 = vmatprep.subr.bf16.mxu0 %v1437
        %1501 = vmatpush1.bf16.msra.mxu0 %v1436
        %1502 = vmatprep.subr.bf16.mxu0 %v1439
        %1503 = vmatpush1.bf16.msra.mxu0 %v1438
        %1504 = vmatprep.subr.bf16.mxu0 %v1441
        %1505 = vmatpush1.bf16.msra.mxu0 %v1440
        %1506 = vmatprep.subr.bf16.mxu0 %v1443
        %1507 = vmatpush1.bf16.msra.mxu0 %v1442
        %1508 = vmatprep.subr.bf16.mxu0 %v1445
        %1509 = vmatpush1.bf16.msra.mxu0 %v1444
        %1510 = vmatprep.subr.bf16.mxu0 %v1447
        %1511 = vmatpush1.bf16.msra.mxu0 %v1446
        %1512 = vmatprep.subr.bf16.mxu0 %v1449
        %1513 = vmatpush1.bf16.msra.mxu0 %v1448
        %1514 = vmatprep.subr.bf16.mxu0 %v1451
        %1515 = vmatpush1.bf16.msra.mxu0 %v1450
        %1516 = vmatprep.subr.bf16.mxu0 %v1453
        %1517 = vmatpush1.bf16.msra.mxu0 %v1452
        %1518 = vmatprep.subr.bf16.mxu0 %v1455
        %1519 = vmatpush1.bf16.msra.mxu0 %v1454
        %1520 = vmatprep.subr.bf16.mxu0 %v1457
        %1521 = vmatpush1.bf16.msra.mxu0 %v1456
        %1522 = vmatprep.subr.bf16.mxu0 %v1459
        %1523 = vmatpush1.bf16.msra.mxu0 %v1458
        %1524 = vmatprep.subr.bf16.mxu0 %v1461
        %1525 = vmatpush1.bf16.msra.mxu0 %v1460
        %1526 = vmatprep.subr.bf16.mxu0 %v1463
        %1527 = vmatpush1.bf16.msra.mxu0 %v1462
        %1528 = vmatprep.subr.bf16.mxu0 %v1465
        %1529 = vmatpush1.bf16.msra.mxu0 %v1464
        %1530 = vmatprep.mubr.bf16.mxu0 %v1291
        %1531 = vmatmul.mubr.bf16.gmra.mrb[0].mxu0 %v1290
        %v1532 = vpop.f32.mrb[0].mxu0
        %v1533 = vadd.f32 0.0, %v1532
        %v1534 = vpop.f32.mrb[0].mxu0
        %v1535 = vadd.f32 0.0, %v1534
        %v1536 = vpop.f32.mrb[0].mxu0
        %v1537 = vadd.f32 0.0, %v1536
        %v1538 = vpop.f32.mrb[0].mxu0
        %v1539 = vadd.f32 0.0, %v1538
        %1540 = vmatprep.mubr.bf16.mxu0 %v1293
        %1541 = vmatmul.mubr.bf16.gmra.mrb[0].mxu0 %v1292
        %v1542 = vpop.f32.mrb[0].mxu0
        %v1543 = vadd.f32 0.0, %v1542
        %v1544 = vpop.f32.mrb[0].mxu0
        %v1545 = vadd.f32 0.0, %v1544
        %v1546 = vpop.f32.mrb[0].mxu0
        %v1547 = vadd.f32 0.0, %v1546
        %v1548 = vpop.f32.mrb[0].mxu0
        %v1549 = vadd.f32 0.0, %v1548
        %1550 = vmatprep.mubr.bf16.mxu0 %v1295
        %1551 = vmatmul.mubr.bf16.gmra.mrb[0].mxu0 %v1294
        %v1552 = vpop.f32.mrb[0].mxu0
        %v1553 = vadd.f32 0.0, %v1552
        %v1554 = vpop.f32.mrb[0].mxu0
        %v1555 = vadd.f32 0.0, %v1554
        %v1556 = vpop.f32.mrb[0].mxu0
        %v1557 = vadd.f32 0.0, %v1556
        %v1558 = vpop.f32.mrb[0].mxu0
        %v1559 = vadd.f32 0.0, %v1558
        %1560 = vmatprep.mubr.bf16.mxu0 %v1297
        %1561 = vmatmul.mubr.bf16.gmra.mrb[0].mxu0 %v1296
        %v1562 = vpop.f32.mrb[0].mxu0
        %v1563 = vadd.f32 0.0, %v1562
        %v1564 = vpop.f32.mrb[0].mxu0
        %v1565 = vadd.f32 0.0, %v1564
        %v1566 = vpop.f32.mrb[0].mxu0
        %v1567 = vadd.f32 0.0, %v1566
        %v1568 = vpop.f32.mrb[0].mxu0
        %v1569 = vadd.f32 0.0, %v1568
        %1570 = vmatprep.mubr.bf16.mxu0 %v1299
        %1571 = vmatmul.mubr.bf16.gmra.mrb[0].mxu0 %v1298
        %v1572 = vpop.f32.mrb[0].mxu0
        %v1573 = vadd.f32 0.0, %v1572
        %v1574 = vpop.f32.mrb[0].mxu0
        %v1575 = vadd.f32 0.0, %v1574
        %v1576 = vpop.f32.mrb[0].mxu0
        %v1577 = vadd.f32 0.0, %v1576
        %v1578 = vpop.f32.mrb[0].mxu0
        %v1579 = vadd.f32 0.0, %v1578
        %1580 = vmatprep.mubr.bf16.mxu0 %v1301
        %1581 = vmatmul.mubr.bf16.gmra.mrb[0].mxu0 %v1300
        %v1582 = vpop.f32.mrb[0].mxu0
        %v1583 = vadd.f32 0.0, %v1582
        %v1584 = vpop.f32.mrb[0].mxu0
        %v1585 = vadd.f32 0.0, %v1584
        %v1586 = vpop.f32.mrb[0].mxu0
        %v1587 = vadd.f32 0.0, %v1586
        %v1588 = vpop.f32.mrb[0].mxu0
        %v1589 = vadd.f32 0.0, %v1588
        %1590 = vmatprep.mubr.bf16.mxu0 %v1303
        %1591 = vmatmul.mubr.bf16.gmra.mrb[0].mxu0 %v1302
        %v1592 = vpop.f32.mrb[0].mxu0
        %v1593 = vadd.f32 0.0, %v1592
        %v1594 = vpop.f32.mrb[0].mxu0
        %v1595 = vadd.f32 0.0, %v1594
        %v1596 = vpop.f32.mrb[0].mxu0
        %v1597 = vadd.f32 0.0, %v1596
        %v1598 = vpop.f32.mrb[0].mxu0
        %v1599 = vadd.f32 0.0, %v1598
        %1600 = vmatprep.mubr.bf16.mxu0 %v1305
        %1601 = vmatmul.mubr.bf16.gmra.mrb[0].mxu0 %v1304
        %v1602 = vpop.f32.mrb[0].mxu0
        %v1603 = vadd.f32 0.0, %v1602
        %v1604 = vpop.f32.mrb[0].mxu0
        %v1605 = vadd.f32 0.0, %v1604
        %v1606 = vpop.f32.mrb[0].mxu0
        %v1607 = vadd.f32 0.0, %v1606
        %v1608 = vpop.f32.mrb[0].mxu0
        %v1609 = vadd.f32 0.0, %v1608
        %1610 = vdwg.mxu0
        %v1611 = vadd.f32 %v1258, %v1533
        %v1612 = vadd.f32 %v1259, %v1535
        %v1613 = vadd.f32 %v1260, %v1537
        %v1614 = vadd.f32 %v1261, %v1539
        %v1615 = vadd.f32 %v1262, %v1543
        %v1616 = vadd.f32 %v1263, %v1545
        %v1617 = vadd.f32 %v1264, %v1547
        %v1618 = vadd.f32 %v1265, %v1549
        %v1619 = vadd.f32 %v1266, %v1553
        %v1620 = vadd.f32 %v1267, %v1555
        %v1621 = vadd.f32 %v1268, %v1557
        %v1622 = vadd.f32 %v1269, %v1559
        %v1623 = vadd.f32 %v1270, %v1563
        %v1624 = vadd.f32 %v1271, %v1565
        %v1625 = vadd.f32 %v1272, %v1567
        %v1626 = vadd.f32 %v1273, %v1569
        %v1627 = vadd.f32 %v1274, %v1573
        %v1628 = vadd.f32 %v1275, %v1575
        %v1629 = vadd.f32 %v1276, %v1577
        %v1630 = vadd.f32 %v1277, %v1579
        %v1631 = vadd.f32 %v1278, %v1583
        %v1632 = vadd.f32 %v1279, %v1585
        %v1633 = vadd.f32 %v1280, %v1587
        %v1634 = vadd.f32 %v1281, %v1589
        %v1635 = vadd.f32 %v1282, %v1593
        %v1636 = vadd.f32 %v1283, %v1595
        %v1637 = vadd.f32 %v1284, %v1597
        %v1638 = vadd.f32 %v1285, %v1599
        %v1639 = vadd.f32 %v1286, %v1603
        %v1640 = vadd.f32 %v1287, %v1605
        %v1641 = vadd.f32 %v1288, %v1607
        %v1642 = vadd.f32 %v1289, %v1609
        %1643 = vst [vmem:[#allocation2] sm:$0xff] %v1611
        %1644 = vst [vmem:[#allocation2 + $0x8] sm:$0xff] %v1612
        %1645 = vst [vmem:[#allocation2 + $0x10] sm:$0xff] %v1613
        %1646 = vst [vmem:[#allocation2 + $0x18] sm:$0xff] %v1614
        %1647 = vst [vmem:[#allocation2 + $0x20] sm:$0xff] %v1615
        %1648 = vst [vmem:[#allocation2 + $0x28] sm:$0xff] %v1616
        %1649 = vst [vmem:[#allocation2 + $0x30] sm:$0xff] %v1617
        %1650 = vst [vmem:[#allocation2 + $0x38] sm:$0xff] %v1618
        %1651 = vst [vmem:[#allocation2 + $0x40] sm:$0xff] %v1619
        %1652 = vst [vmem:[#allocation2 + $0x48] sm:$0xff] %v1620
        %1653 = vst [vmem:[#allocation2 + $0x50] sm:$0xff] %v1621
        %1654 = vst [vmem:[#allocation2 + $0x58] sm:$0xff] %v1622
        %1655 = vst [vmem:[#allocation2 + $0x60] sm:$0xff] %v1623
        %1656 = vst [vmem:[#allocation2 + $0x68] sm:$0xff] %v1624
        %1657 = vst [vmem:[#allocation2 + $0x70] sm:$0xff] %v1625
        %1658 = vst [vmem:[#allocation2 + $0x78] sm:$0xff] %v1626
        %1659 = vst [vmem:[#allocation2 + $0x80] sm:$0xff] %v1627
        %1660 = vst [vmem:[#allocation2 + $0x88] sm:$0xff] %v1628
        %1661 = vst [vmem:[#allocation2 + $0x90] sm:$0xff] %v1629
        %1662 = vst [vmem:[#allocation2 + $0x98] sm:$0xff] %v1630
        %1663 = vst [vmem:[#allocation2 + $0xa0] sm:$0xff] %v1631
        %1664 = vst [vmem:[#allocation2 + $0xa8] sm:$0xff] %v1632
        %1665 = vst [vmem:[#allocation2 + $0xb0] sm:$0xff] %v1633
        %1666 = vst [vmem:[#allocation2 + $0xb8] sm:$0xff] %v1634
        %1667 = vst [vmem:[#allocation2 + $0xc0] sm:$0xff] %v1635
        %1668 = vst [vmem:[#allocation2 + $0xc8] sm:$0xff] %v1636
        %1669 = vst [vmem:[#allocation2 + $0xd0] sm:$0xff] %v1637
        %1670 = vst [vmem:[#allocation2 + $0xd8] sm:$0xff] %v1638
        %1671 = vst [vmem:[#allocation2 + $0xe0] sm:$0xff] %v1639
        %1672 = vst [vmem:[#allocation2 + $0xe8] sm:$0xff] %v1640
        %1673 = vst [vmem:[#allocation2 + $0xf0] sm:$0xff] %v1641
        %1674 = vst [vmem:[#allocation2 + $0xf8] sm:$0xff] %v1642
        %p1675 = scmp.eq.s32.totalorder %s24, 1
        // Predicated region
        $region49: #{tpu_custom_call.1} parent=31 // pred_check
          %p1676 = pneg %p1675
        $region50: #{tpu_custom_call.1} parent=31 // pred_check_branch
          %1678 = sbr.rel (%p1676) target = $region52
        $region51: #{tpu_custom_call.1} parent=31 // pred_region
          %v1679 = vld [vmem:[#allocation2] sm:$0xff]
          %v1680 = vld [vmem:[#allocation2 + $0x8] sm:$0xff]
          %v1681 = vld [vmem:[#allocation2 + $0x10] sm:$0xff]
          %v1682 = vld [vmem:[#allocation2 + $0x18] sm:$0xff]
          %v1683 = vld [vmem:[#allocation2 + $0x20] sm:$0xff]
          %v1684 = vld [vmem:[#allocation2 + $0x28] sm:$0xff]
          %v1685 = vld [vmem:[#allocation2 + $0x30] sm:$0xff]
          %v1686 = vld [vmem:[#allocation2 + $0x38] sm:$0xff]
          %v1687 = vld [vmem:[#allocation2 + $0x40] sm:$0xff]
          %v1688 = vld [vmem:[#allocation2 + $0x48] sm:$0xff]
          %v1689 = vld [vmem:[#allocation2 + $0x50] sm:$0xff]
          %v1690 = vld [vmem:[#allocation2 + $0x58] sm:$0xff]
          %v1691 = vld [vmem:[#allocation2 + $0x60] sm:$0xff]
          %v1692 = vld [vmem:[#allocation2 + $0x68] sm:$0xff]
          %v1693 = vld [vmem:[#allocation2 + $0x70] sm:$0xff]
          %v1694 = vld [vmem:[#allocation2 + $0x78] sm:$0xff]
          %v1695 = vld [vmem:[#allocation2 + $0x80] sm:$0xff]
          %v1696 = vld [vmem:[#allocation2 + $0x88] sm:$0xff]
          %v1697 = vld [vmem:[#allocation2 + $0x90] sm:$0xff]
          %v1698 = vld [vmem:[#allocation2 + $0x98] sm:$0xff]
          %v1699 = vld [vmem:[#allocation2 + $0xa0] sm:$0xff]
          %v1700 = vld [vmem:[#allocation2 + $0xa8] sm:$0xff]
          %v1701 = vld [vmem:[#allocation2 + $0xb0] sm:$0xff]
          %v1702 = vld [vmem:[#allocation2 + $0xb8] sm:$0xff]
          %v1703 = vld [vmem:[#allocation2 + $0xc0] sm:$0xff]
          %v1704 = vld [vmem:[#allocation2 + $0xc8] sm:$0xff]
          %v1705 = vld [vmem:[#allocation2 + $0xd0] sm:$0xff]
          %v1706 = vld [vmem:[#allocation2 + $0xd8] sm:$0xff]
          %v1707 = vld [vmem:[#allocation2 + $0xe0] sm:$0xff]
          %v1708 = vld [vmem:[#allocation2 + $0xe8] sm:$0xff]
          %v1709 = vld [vmem:[#allocation2 + $0xf0] sm:$0xff]
          %v1710 = vld [vmem:[#allocation2 + $0xf8] sm:$0xff]
          %v1711 = vpack.c.bf16 %v1681, %v1679
          %v1712 = vpack.c.bf16 %v1682, %v1680
          %v1713 = vpack.c.bf16 %v1685, %v1683
          %v1714 = vpack.c.bf16 %v1686, %v1684
          %v1715 = vpack.c.bf16 %v1689, %v1687
          %v1716 = vpack.c.bf16 %v1690, %v1688
          %v1717 = vpack.c.bf16 %v1693, %v1691
          %v1718 = vpack.c.bf16 %v1694, %v1692
          %v1719 = vpack.c.bf16 %v1697, %v1695
          %v1720 = vpack.c.bf16 %v1698, %v1696
          %v1721 = vpack.c.bf16 %v1701, %v1699
          %v1722 = vpack.c.bf16 %v1702, %v1700
          %v1723 = vpack.c.bf16 %v1705, %v1703
          %v1724 = vpack.c.bf16 %v1706, %v1704
          %v1725 = vpack.c.bf16 %v1709, %v1707
          %v1726 = vpack.c.bf16 %v1710, %v1708
          %v1743 = vunpack.c.l.b16 %v1711
          %v1744 = vunpack.c.l.b16 %v1712
          %v1745 = vunpack.c.h.b16 %v1711
          %v1746 = vunpack.c.h.b16 %v1712
          %v1747 = vunpack.c.l.b16 %v1713
          %v1748 = vunpack.c.l.b16 %v1714
          %v1749 = vunpack.c.h.b16 %v1713
          %v1750 = vunpack.c.h.b16 %v1714
          %v1751 = vunpack.c.l.b16 %v1715
          %v1752 = vunpack.c.l.b16 %v1716
          %v1753 = vunpack.c.h.b16 %v1715
          %v1754 = vunpack.c.h.b16 %v1716
          %v1755 = vunpack.c.l.b16 %v1717
          %v1756 = vunpack.c.l.b16 %v1718
          %v1757 = vunpack.c.h.b16 %v1717
          %v1758 = vunpack.c.h.b16 %v1718
          %v1759 = vunpack.c.l.b16 %v1719
          %v1760 = vunpack.c.l.b16 %v1720
          %v1761 = vunpack.c.h.b16 %v1719
          %v1762 = vunpack.c.h.b16 %v1720
          %v1763 = vunpack.c.l.b16 %v1721
          %v1764 = vunpack.c.l.b16 %v1722
          %v1765 = vunpack.c.h.b16 %v1721
          %v1766 = vunpack.c.h.b16 %v1722
          %v1767 = vunpack.c.l.b16 %v1723
          %v1768 = vunpack.c.l.b16 %v1724
          %v1769 = vunpack.c.h.b16 %v1723
          %v1770 = vunpack.c.h.b16 %v1724
          %v1771 = vunpack.c.l.b16 %v1725
          %v1772 = vunpack.c.l.b16 %v1726
          %v1773 = vunpack.c.h.b16 %v1725
          %v1774 = vunpack.c.h.b16 %v1726
          %v1775 = vpack.c.b16 %v1744, %v1743
          %v1776 = vpack.c.b16 %v1746, %v1745
          %v1777 = vpack.c.b16 %v1748, %v1747
          %v1778 = vpack.c.b16 %v1750, %v1749
          %v1779 = vpack.c.b16 %v1752, %v1751
          %v1780 = vpack.c.b16 %v1754, %v1753
          %v1781 = vpack.c.b16 %v1756, %v1755
          %v1782 = vpack.c.b16 %v1758, %v1757
          %v1783 = vpack.c.b16 %v1760, %v1759
          %v1784 = vpack.c.b16 %v1762, %v1761
          %v1785 = vpack.c.b16 %v1764, %v1763
          %v1786 = vpack.c.b16 %v1766, %v1765
          %v1787 = vpack.c.b16 %v1768, %v1767
          %v1788 = vpack.c.b16 %v1770, %v1769
          %v1789 = vpack.c.b16 %v1772, %v1771
          %v1790 = vpack.c.b16 %v1774, %v1773
          %1807 = vst [vmem:[#allocation9] sm:$0xff] %v1775
          %1808 = vst [vmem:[#allocation9 + $0x8] sm:$0xff] %v1776
          %1809 = vst [vmem:[#allocation9 + $0x10] sm:$0xff] %v1777
          %1810 = vst [vmem:[#allocation9 + $0x18] sm:$0xff] %v1778
          %1811 = vst [vmem:[#allocation9 + $0x20] sm:$0xff] %v1779
          %1812 = vst [vmem:[#allocation9 + $0x28] sm:$0xff] %v1780
          %1813 = vst [vmem:[#allocation9 + $0x30] sm:$0xff] %v1781
          %1814 = vst [vmem:[#allocation9 + $0x38] sm:$0xff] %v1782
          %1815 = vst [vmem:[#allocation9 + $0x40] sm:$0xff] %v1783
          %1816 = vst [vmem:[#allocation9 + $0x48] sm:$0xff] %v1784
          %1817 = vst [vmem:[#allocation9 + $0x50] sm:$0xff] %v1785
          %1818 = vst [vmem:[#allocation9 + $0x58] sm:$0xff] %v1786
          %1819 = vst [vmem:[#allocation9 + $0x60] sm:$0xff] %v1787
          %1820 = vst [vmem:[#allocation9 + $0x68] sm:$0xff] %v1788
          %1821 = vst [vmem:[#allocation9 + $0x70] sm:$0xff] %v1789
          %1822 = vst [vmem:[#allocation9 + $0x78] sm:$0xff] %v1790
        $region52: #{tpu_custom_call.1} parent=31 // pred_fallthru
          _
        // Predicated region
        $region53: #{tpu_custom_call.1} parent=31 // pred_check
          %p1823 = pneg %p127
        $region54: #{tpu_custom_call.1} parent=31 // pred_check_branch
          %1825 = sbr.rel (%p1823) target = $region56
        $region55: #{tpu_custom_call.1} parent=31 // pred_region
          %s1826 = smul.u32 16, %s23
          %s1828 = ssub.s32 2048, 2048
          %1829 = vsyncadd [#allocation5], %s1828
          %s1830 = smul.addr %s1826, 2
          %s1831 = smul.addr %s1830, 64
          %s1832 = scalar_lea.hbm %s3, %s1831
          %s1833 = sshll.u32 [#allocation9], 4
          %s1834 = int_to_ptr.vmem [resolvable:$true] %s1833
          %1839 = dma.vmem_to_hbm [thread:$0]  %s1834, 2048, %s1832, [#allocation5], 128, 128, 8
        $region56: #{tpu_custom_call.1} parent=31 // pred_fallthru
          _
        // Predicated region
        $region57: #{tpu_custom_call.1} parent=31 // pred_check
          %p1840 = pneg %p127
        $region58: #{tpu_custom_call.1} parent=31 // pred_check_branch
          %1842 = sbr.rel (%p1840) target = $region60
        $region59: #{tpu_custom_call.1} parent=31 // pred_region
          %1843 = dma.done [#allocation5], 2048
        $region60: #{tpu_custom_call.1} parent=31 // pred_fallthru
          _
      $region32: #{tpu_custom_call.1} parent=5 // pred_fallthru
        _
      %p1844 = scmp.le.s32.totalorder 2, %s14
      // Predicated region
      $region61: #{tpu_custom_call.1} parent=5 // pred_check
        %p1845 = pneg %p1844
      $region62: #{tpu_custom_call.1} parent=5 // pred_check_branch
        %1847 = sbr.rel (%p1845) target = $region64
      $region63: #{tpu_custom_call.1} parent=5 // pred_region
        %s1848 = ssub.s32 %s14, 2
      $region64: #{tpu_custom_call.1} parent=5 // pred_fallthru
        _
    $region6: #{tpu_custom_call.1} parent=1 // loop_footer
      %s18 = sadd.s32 1, %s14
    $region7: #{tpu_custom_call.1} parent=1 // loop_footer_branch
      %13 = sbr.rel target = $region3
    $region8: #{tpu_custom_call.1} parent=1 // loop_exit
      _
    %1849 = vsyncpa [#allocation4], 1
    %s1850 = scalar_lea.sflag [#allocation4], 1
    %1851 = vsyncpa %s1850, 1
    %1852 = vsyncpa [#allocation7], 1
    %s1853 = scalar_lea.sflag [#allocation7], 1
    %1854 = vsyncpa %s1853, 1
    %1855 = vsyncpa [#allocation5], 1
    %s1856 = scalar_lea.sflag [#allocation5], 1
    %1857 = vsyncpa %s1856, 1

</llo_original>
